<compile_context>
chip_gen: v7x
topology: tpu7x:2x2x1
jax: 0.10.0
libtpu: 0.0.40
codegen_flags: <defaults>
</compile_context>

<pallas_src>
import functools
import math

import numpy as np

import jax
import jax.numpy as jnp
from jax.experimental import pallas as pl
from jax.experimental.pallas import tpu as pltpu

EPS = 1e-5


# ---------------- fused Bottleneck kernel ----------------

def _bottleneck_kernel(x_ref, g1_ref, b1_ref, w1_ref, g2_ref, b2_ref,
                       w2s_ref, mask_ref, o_ref, *, growth, gp, width):
    # x_ref:   (Cin, M)           input, channels-major, M = N*H*W on the lane axis
    # g1,b1:   (Cin, 1)           BN1 affine
    # w1:      (planes, Cin)      1x1 conv weight
    # g2,b2:   (planes, 1)        BN2 affine
    # w2s:     (9*gp, planes)     stacked per-tap 3x3 weights, tap k = 3*ky + kx,
    #                             each tap zero-padded from `growth` to `gp` rows
    # mask:    (9, 1, M)          1.0 where tap k is spatially valid, else 0.0
    # o_ref:   (growth + Cin, M)  rows [0, growth) = conv2 output, rest = x passthrough
    x = x_ref[...]
    m = x.shape[1]

    # ---- BN1 (batch statistics, biased variance) + ReLU ----
    mu1 = jnp.mean(x, axis=1, keepdims=True)
    var1 = jnp.mean(jnp.square(x - mu1), axis=1, keepdims=True)
    a1 = (x - mu1) * jax.lax.rsqrt(var1 + EPS) * g1_ref[...] + b1_ref[...]
    a1 = jnp.maximum(a1, 0.0)

    # ---- 1x1 conv as a lane-dense MXU matmul: (planes, Cin) @ (Cin, M) ----
    h1 = jnp.dot(w1_ref[...], a1, preferred_element_type=jnp.float32)

    # ---- BN2 + ReLU ----
    mu2 = jnp.mean(h1, axis=1, keepdims=True)
    var2 = jnp.mean(jnp.square(h1 - mu2), axis=1, keepdims=True)
    h2 = (h1 - mu2) * jax.lax.rsqrt(var2 + EPS) * g2_ref[...] + b2_ref[...]
    h2 = jnp.maximum(h2, 0.0)

    # ---- 3x3 conv (padding=1): ONE stacked matmul for all 9 taps, then
    #      per-tap spatial shift (pltpu.roll) + border mask + accumulate. ----
    taps = jnp.dot(w2s_ref[...], h2, preferred_element_type=jnp.float32)  # (9*gp, M)

    # Center tap (ky=kx=1): no spatial shift and always valid -> no roll, no mask.
    acc = taps[4 * gp:5 * gp, :]
    for k in range(9):
        if k == 4:
            continue
        ky, kx = k // 3, k % 3
        # The matmul over channels is per-position, so the spatial shift is applied to
        # the (small) per-tap matmul result instead of the (large) conv input.
        delta = (ky - 1) * width + (kx - 1)
        base = taps[k * gp:(k + 1) * gp, :]                  # sublane-aligned slice
        base = pltpu.roll(base, shift=(-delta) % m, axis=1)  # out[p] <- base[p + delta]
        acc = acc + base * mask_ref[k]

    # ---- DenseNet Cat(out, x): new growth channels first, then the input ----
    o_ref[0:growth, :] = acc[0:growth, :]
    o_ref[growth:, :] = x


def _tap_masks(n, h, w):
    """(9, 1, N*H*W) f32 validity masks for the 9 taps of a padded 3x3 conv."""
    masks = np.zeros((9, 1, n * h * w), np.float32)
    yy, xx = np.meshgrid(np.arange(h), np.arange(w), indexing="ij")
    for ky in range(3):
        for kx in range(3):
            valid = ((yy + ky - 1 >= 0) & (yy + ky - 1 < h) &
                     (xx + kx - 1 >= 0) & (xx + kx - 1 < w)).astype(np.float32)
            masks[3 * ky + kx, 0, :] = np.tile(valid.reshape(-1), n)
    return jnp.asarray(masks)


def bottleneck_forward(x, params):
    """Bottleneck forward pass. x: (N, C, H, W) f32 -> (N, C + growth, H, W) f32."""
    n, c, h, w = x.shape
    m = n * h * w
    growth, planes = params["w2"].shape[0], params["w2"].shape[1]
    gp = ((growth + 7) // 8) * 8  # per-tap row count padded to a sublane multiple

    # Layout plumbing (XLA glue): NCHW -> channels-major (C, M) so M sits on lanes.
    x_t = jnp.transpose(x, (1, 0, 2, 3)).reshape(c, m).astype(jnp.float32)
    w1 = params["w1"].reshape(planes, c).astype(jnp.float32)                # (planes, Cin)
    # (growth, planes, 3, 3) -> (9, growth, planes) -> pad rows to gp -> (9*gp, planes)
    w2 = jnp.transpose(params["w2"], (2, 3, 0, 1)).reshape(9, growth, planes)
    w2 = jnp.pad(w2.astype(jnp.float32), ((0, 0), (0, gp - growth), (0, 0)))
    w2 = w2.reshape(9 * gp, planes)
    g1 = params["g1"].reshape(c, 1).astype(jnp.float32)
    b1 = params["b1"].reshape(c, 1).astype(jnp.float32)
    g2 = params["g2"].reshape(planes, 1).astype(jnp.float32)
    b2 = params["b2"].reshape(planes, 1).astype(jnp.float32)
    masks = _tap_masks(n, h, w)

    kernel = functools.partial(_bottleneck_kernel, growth=growth, gp=gp, width=w)
    vmem = pl.BlockSpec(memory_space=pltpu.MemorySpace.VMEM)
    out = pl.pallas_call(
        kernel,
        out_shape=jax.ShapeDtypeStruct((growth + c, m), jnp.float32),
        in_specs=[vmem] * 8,
        out_specs=vmem,
    )(x_t, g1, b1, w1, g2, b2, w2, masks)

    # (C_total, M) -> (N, C_total, H, W)
    return out.reshape(growth + c, n, h, w).transpose(1, 0, 2, 3)


# ---------------- pure-JAX reference (mirrors the PyTorch module) ----------------

def bottleneck_reference(x, params):
    def bn(v, g, b):
        mean = v.mean(axis=(0, 2, 3), keepdims=True)
        var = jnp.square(v - mean).mean(axis=(0, 2, 3), keepdims=True)
        return (v - mean) * jax.lax.rsqrt(var + EPS) * g.reshape(1, -1, 1, 1) \
            + b.reshape(1, -1, 1, 1)

    h = jax.nn.relu(bn(x, params["g1"], params["b1"]))
    h = jax.lax.conv_general_dilated(
        h, params["w1"], (1, 1), "VALID",
        dimension_numbers=("NCHW", "OIHW", "NCHW"),
        precision=jax.lax.Precision.HIGHEST)
    h = jax.nn.relu(bn(h, params["g2"], params["b2"]))
    h = jax.lax.conv_general_dilated(
        h, params["w2"], (1, 1), ((1, 1), (1, 1)),
        dimension_numbers=("NCHW", "OIHW", "NCHW"),
        precision=jax.lax.Precision.HIGHEST)
    return jnp.concatenate([h, x], axis=1)


# ---------------- demo ----------------

if __name__ == "__main__":
    key = jax.random.PRNGKey(0)
    ks = jax.random.split(key, 7)

    # Small CIFAR-like shapes: inplanes=24 (2*growthRate), 16x16 spatial, batch 2.
    N, C, H, W = 2, 24, 16, 16
    expansion, growth = 4, 12
    planes = expansion * growth

    x = jax.random.normal(ks[0], (N, C, H, W), dtype=jnp.float32)
    params = {
        "g1": 1.0 + 0.1 * jax.random.normal(ks[1], (C,), dtype=jnp.float32),
        "b1": 0.1 * jax.random.normal(ks[2], (C,), dtype=jnp.float32),
        "w1": jax.random.normal(ks[3], (planes, C, 1, 1), dtype=jnp.float32)
              * math.sqrt(2.0 / C),
        "g2": 1.0 + 0.1 * jax.random.normal(ks[4], (planes,), dtype=jnp.float32),
        "b2": 0.1 * jax.random.normal(ks[5], (planes,), dtype=jnp.float32),
        "w2": jax.random.normal(ks[6], (growth, planes, 3, 3), dtype=jnp.float32)
              * math.sqrt(2.0 / (9 * planes)),
    }

    fwd = jax.jit(lambda xx: bottleneck_forward(xx, params))
    out = fwd(x)
    jax.block_until_ready(out)
    assert out.shape == (N, C + growth, H, W)

    ref = bottleneck_reference(x, params)
    err = float(jnp.max(jnp.abs(out - ref)))
    assert err < 3e-2, f"max abs error {err}"

    print("KERNEL_OK")
</pallas_src>

<mosaic_0001>
module attributes {stable_mosaic.version = 11 : i64} {
  func.func @_bottleneck_kernel(%arg0: memref<24x512xf32, #tpu.memory_space<vmem>>, %arg1: memref<24x1xf32, #tpu.memory_space<vmem>>, %arg2: memref<24x1xf32, #tpu.memory_space<vmem>>, %arg3: memref<48x24xf32, #tpu.memory_space<vmem>>, %arg4: memref<48x1xf32, #tpu.memory_space<vmem>>, %arg5: memref<48x1xf32, #tpu.memory_space<vmem>>, %arg6: memref<144x48xf32, #tpu.memory_space<vmem>>, %arg7: memref<9x1x512xf32, #tpu.memory_space<vmem>>, %arg8: memref<36x512xf32, #tpu.memory_space<vmem>>) attributes {dimension_semantics = [], scalar_prefetch = 0 : i64, scratch_operands = 0 : i64, tpu.core_type = #tpu.core_type<tc>} {
    %c0 = arith.constant 0 : index
    %c0_0 = arith.constant 0 : index
    %0 = vector.load %arg0[%c0, %c0_0] : memref<24x512xf32, #tpu.memory_space<vmem>>, vector<24x512xf32>
    %cst = arith.constant dense<0.000000e+00> : vector<24xf32>
    %1 = vector.multi_reduction <add>, %0, %cst [1] : vector<24x512xf32> to vector<24xf32>
    %2 = vector.shape_cast %1 : vector<24xf32> to vector<24x1xf32>
    %cst_1 = arith.constant 5.120000e+02 : f32
    %3 = vector.broadcast %cst_1 : f32 to vector<24x1xf32>
    %4 = arith.divf %2, %3 : vector<24x1xf32>
    %5 = vector.broadcast %4 : vector<24x1xf32> to vector<24x512xf32>
    %6 = arith.subf %0, %5 : vector<24x512xf32>
    %7 = arith.mulf %6, %6 : vector<24x512xf32>
    %cst_2 = arith.constant dense<0.000000e+00> : vector<24xf32>
    %8 = vector.multi_reduction <add>, %7, %cst_2 [1] : vector<24x512xf32> to vector<24xf32>
    %9 = vector.shape_cast %8 : vector<24xf32> to vector<24x1xf32>
    %cst_3 = arith.constant 5.120000e+02 : f32
    %10 = vector.broadcast %cst_3 : f32 to vector<24x1xf32>
    %11 = arith.divf %9, %10 : vector<24x1xf32>
    %12 = vector.broadcast %4 : vector<24x1xf32> to vector<24x512xf32>
    %13 = arith.subf %0, %12 : vector<24x512xf32>
    %cst_4 = arith.constant 9.99999974E-6 : f32
    %14 = vector.broadcast %cst_4 : f32 to vector<24x1xf32>
    %15 = arith.addf %11, %14 : vector<24x1xf32>
    %16 = math.rsqrt %15 : vector<24x1xf32>
    %17 = vector.broadcast %16 : vector<24x1xf32> to vector<24x512xf32>
    %18 = arith.mulf %13, %17 : vector<24x512xf32>
    %c0_5 = arith.constant 0 : index
    %c0_6 = arith.constant 0 : index
    %19 = vector.load %arg1[%c0_5, %c0_6] : memref<24x1xf32, #tpu.memory_space<vmem>>, vector<24x1xf32>
    %20 = vector.broadcast %19 : vector<24x1xf32> to vector<24x512xf32>
    %21 = arith.mulf %18, %20 : vector<24x512xf32>
    %c0_7 = arith.constant 0 : index
    %c0_8 = arith.constant 0 : index
    %22 = vector.load %arg2[%c0_7, %c0_8] : memref<24x1xf32, #tpu.memory_space<vmem>>, vector<24x1xf32>
    %23 = vector.broadcast %22 : vector<24x1xf32> to vector<24x512xf32>
    %24 = arith.addf %21, %23 : vector<24x512xf32>
    %cst_9 = arith.constant 0.000000e+00 : f32
    %25 = vector.broadcast %cst_9 : f32 to vector<24x512xf32>
    %26 = arith.maximumf %24, %25 : vector<24x512xf32>
    %c0_10 = arith.constant 0 : index
    %c0_11 = arith.constant 0 : index
    %27 = vector.load %arg3[%c0_10, %c0_11] : memref<48x24xf32, #tpu.memory_space<vmem>>, vector<48x24xf32>
    %cst_12 = arith.constant dense<0.000000e+00> : vector<48x512xf32>
    %28 = tpu.matmul %27, %26, %cst_12 {dimension_numbers = #tpu.dot_dimension_numbers<[1], [0], [0], [1], [0, 0, 1, 1], [], []>} : vector<48x24xf32>, vector<24x512xf32>, vector<48x512xf32> -> vector<48x512xf32>
    %cst_13 = arith.constant dense<0.000000e+00> : vector<48xf32>
    %29 = vector.multi_reduction <add>, %28, %cst_13 [1] : vector<48x512xf32> to vector<48xf32>
    %30 = vector.shape_cast %29 : vector<48xf32> to vector<48x1xf32>
    %cst_14 = arith.constant 5.120000e+02 : f32
    %31 = vector.broadcast %cst_14 : f32 to vector<48x1xf32>
    %32 = arith.divf %30, %31 : vector<48x1xf32>
    %33 = vector.broadcast %32 : vector<48x1xf32> to vector<48x512xf32>
    %34 = arith.subf %28, %33 : vector<48x512xf32>
    %35 = arith.mulf %34, %34 : vector<48x512xf32>
    %cst_15 = arith.constant dense<0.000000e+00> : vector<48xf32>
    %36 = vector.multi_reduction <add>, %35, %cst_15 [1] : vector<48x512xf32> to vector<48xf32>
    %37 = vector.shape_cast %36 : vector<48xf32> to vector<48x1xf32>
    %cst_16 = arith.constant 5.120000e+02 : f32
    %38 = vector.broadcast %cst_16 : f32 to vector<48x1xf32>
    %39 = arith.divf %37, %38 : vector<48x1xf32>
    %40 = vector.broadcast %32 : vector<48x1xf32> to vector<48x512xf32>
    %41 = arith.subf %28, %40 : vector<48x512xf32>
    %cst_17 = arith.constant 9.99999974E-6 : f32
    %42 = vector.broadcast %cst_17 : f32 to vector<48x1xf32>
    %43 = arith.addf %39, %42 : vector<48x1xf32>
    %44 = math.rsqrt %43 : vector<48x1xf32>
    %45 = vector.broadcast %44 : vector<48x1xf32> to vector<48x512xf32>
    %46 = arith.mulf %41, %45 : vector<48x512xf32>
    %c0_18 = arith.constant 0 : index
    %c0_19 = arith.constant 0 : index
    %47 = vector.load %arg4[%c0_18, %c0_19] : memref<48x1xf32, #tpu.memory_space<vmem>>, vector<48x1xf32>
    %48 = vector.broadcast %47 : vector<48x1xf32> to vector<48x512xf32>
    %49 = arith.mulf %46, %48 : vector<48x512xf32>
    %c0_20 = arith.constant 0 : index
    %c0_21 = arith.constant 0 : index
    %50 = vector.load %arg5[%c0_20, %c0_21] : memref<48x1xf32, #tpu.memory_space<vmem>>, vector<48x1xf32>
    %51 = vector.broadcast %50 : vector<48x1xf32> to vector<48x512xf32>
    %52 = arith.addf %49, %51 : vector<48x512xf32>
    %cst_22 = arith.constant 0.000000e+00 : f32
    %53 = vector.broadcast %cst_22 : f32 to vector<48x512xf32>
    %54 = arith.maximumf %52, %53 : vector<48x512xf32>
    %c0_23 = arith.constant 0 : index
    %c0_24 = arith.constant 0 : index
    %55 = vector.load %arg6[%c0_23, %c0_24] : memref<144x48xf32, #tpu.memory_space<vmem>>, vector<144x48xf32>
    %cst_25 = arith.constant dense<0.000000e+00> : vector<144x512xf32>
    %56 = tpu.matmul %55, %54, %cst_25 {dimension_numbers = #tpu.dot_dimension_numbers<[1], [0], [0], [1], [0, 0, 1, 1], [], []>} : vector<144x48xf32>, vector<48x512xf32>, vector<144x512xf32> -> vector<144x512xf32>
    %57 = vector.extract_strided_slice %56 {offsets = [64, 0], sizes = [16, 512], strides = [1, 1]} : vector<144x512xf32> to vector<16x512xf32>
    %58 = vector.extract_strided_slice %56 {offsets = [0, 0], sizes = [16, 512], strides = [1, 1]} : vector<144x512xf32> to vector<16x512xf32>
    %c17_i32 = arith.constant 17 : i32
    %59 = tpu.dynamic_rotate %58 by %c17_i32 dim 1 : vector<16x512xf32>, i32 -> vector<16x512xf32>
    %c0_26 = arith.constant 0 : index
    %c0_27 = arith.constant 0 : index
    %c0_28 = arith.constant 0 : index
    %60 = vector.load %arg7[%c0_26, %c0_27, %c0_28] : memref<9x1x512xf32, #tpu.memory_space<vmem>>, vector<1x1x512xf32>
    %61 = vector.shape_cast %60 : vector<1x1x512xf32> to vector<1x512xf32>
    %62 = vector.broadcast %61 : vector<1x512xf32> to vector<16x512xf32>
    %63 = arith.mulf %59, %62 : vector<16x512xf32>
    %64 = arith.addf %57, %63 : vector<16x512xf32>
    %65 = vector.extract_strided_slice %56 {offsets = [16, 0], sizes = [16, 512], strides = [1, 1]} : vector<144x512xf32> to vector<16x512xf32>
    %c16_i32 = arith.constant 16 : i32
    %66 = tpu.dynamic_rotate %65 by %c16_i32 dim 1 : vector<16x512xf32>, i32 -> vector<16x512xf32>
    %c1 = arith.constant 1 : index
    %c0_29 = arith.constant 0 : index
    %c0_30 = arith.constant 0 : index
    %67 = vector.load %arg7[%c1, %c0_29, %c0_30] : memref<9x1x512xf32, #tpu.memory_space<vmem>>, vector<1x1x512xf32>
    %68 = vector.shape_cast %67 : vector<1x1x512xf32> to vector<1x512xf32>
    %69 = vector.broadcast %68 : vector<1x512xf32> to vector<16x512xf32>
    %70 = arith.mulf %66, %69 : vector<16x512xf32>
    %71 = arith.addf %64, %70 : vector<16x512xf32>
    %72 = vector.extract_strided_slice %56 {offsets = [32, 0], sizes = [16, 512], strides = [1, 1]} : vector<144x512xf32> to vector<16x512xf32>
    %c15_i32 = arith.constant 15 : i32
    %73 = tpu.dynamic_rotate %72 by %c15_i32 dim 1 : vector<16x512xf32>, i32 -> vector<16x512xf32>
    %c2 = arith.constant 2 : index
    %c0_31 = arith.constant 0 : index
    %c0_32 = arith.constant 0 : index
    %74 = vector.load %arg7[%c2, %c0_31, %c0_32] : memref<9x1x512xf32, #tpu.memory_space<vmem>>, vector<1x1x512xf32>
    %75 = vector.shape_cast %74 : vector<1x1x512xf32> to vector<1x512xf32>
    %76 = vector.broadcast %75 : vector<1x512xf32> to vector<16x512xf32>
    %77 = arith.mulf %73, %76 : vector<16x512xf32>
    %78 = arith.addf %71, %77 : vector<16x512xf32>
    %79 = vector.extract_strided_slice %56 {offsets = [48, 0], sizes = [16, 512], strides = [1, 1]} : vector<144x512xf32> to vector<16x512xf32>
    %c1_i32 = arith.constant 1 : i32
    %80 = tpu.dynamic_rotate %79 by %c1_i32 dim 1 : vector<16x512xf32>, i32 -> vector<16x512xf32>
    %c3 = arith.constant 3 : index
    %c0_33 = arith.constant 0 : index
    %c0_34 = arith.constant 0 : index
    %81 = vector.load %arg7[%c3, %c0_33, %c0_34] : memref<9x1x512xf32, #tpu.memory_space<vmem>>, vector<1x1x512xf32>
    %82 = vector.shape_cast %81 : vector<1x1x512xf32> to vector<1x512xf32>
    %83 = vector.broadcast %82 : vector<1x512xf32> to vector<16x512xf32>
    %84 = arith.mulf %80, %83 : vector<16x512xf32>
    %85 = arith.addf %78, %84 : vector<16x512xf32>
    %86 = vector.extract_strided_slice %56 {offsets = [80, 0], sizes = [16, 512], strides = [1, 1]} : vector<144x512xf32> to vector<16x512xf32>
    %c511_i32 = arith.constant 511 : i32
    %87 = tpu.dynamic_rotate %86 by %c511_i32 dim 1 : vector<16x512xf32>, i32 -> vector<16x512xf32>
    %c5 = arith.constant 5 : index
    %c0_35 = arith.constant 0 : index
    %c0_36 = arith.constant 0 : index
    %88 = vector.load %arg7[%c5, %c0_35, %c0_36] : memref<9x1x512xf32, #tpu.memory_space<vmem>>, vector<1x1x512xf32>
    %89 = vector.shape_cast %88 : vector<1x1x512xf32> to vector<1x512xf32>
    %90 = vector.broadcast %89 : vector<1x512xf32> to vector<16x512xf32>
    %91 = arith.mulf %87, %90 : vector<16x512xf32>
    %92 = arith.addf %85, %91 : vector<16x512xf32>
    %93 = vector.extract_strided_slice %56 {offsets = [96, 0], sizes = [16, 512], strides = [1, 1]} : vector<144x512xf32> to vector<16x512xf32>
    %c497_i32 = arith.constant 497 : i32
    %94 = tpu.dynamic_rotate %93 by %c497_i32 dim 1 : vector<16x512xf32>, i32 -> vector<16x512xf32>
    %c6 = arith.constant 6 : index
    %c0_37 = arith.constant 0 : index
    %c0_38 = arith.constant 0 : index
    %95 = vector.load %arg7[%c6, %c0_37, %c0_38] : memref<9x1x512xf32, #tpu.memory_space<vmem>>, vector<1x1x512xf32>
    %96 = vector.shape_cast %95 : vector<1x1x512xf32> to vector<1x512xf32>
    %97 = vector.broadcast %96 : vector<1x512xf32> to vector<16x512xf32>
    %98 = arith.mulf %94, %97 : vector<16x512xf32>
    %99 = arith.addf %92, %98 : vector<16x512xf32>
    %100 = vector.extract_strided_slice %56 {offsets = [112, 0], sizes = [16, 512], strides = [1, 1]} : vector<144x512xf32> to vector<16x512xf32>
    %c496_i32 = arith.constant 496 : i32
    %101 = tpu.dynamic_rotate %100 by %c496_i32 dim 1 : vector<16x512xf32>, i32 -> vector<16x512xf32>
    %c7 = arith.constant 7 : index
    %c0_39 = arith.constant 0 : index
    %c0_40 = arith.constant 0 : index
    %102 = vector.load %arg7[%c7, %c0_39, %c0_40] : memref<9x1x512xf32, #tpu.memory_space<vmem>>, vector<1x1x512xf32>
    %103 = vector.shape_cast %102 : vector<1x1x512xf32> to vector<1x512xf32>
    %104 = vector.broadcast %103 : vector<1x512xf32> to vector<16x512xf32>
    %105 = arith.mulf %101, %104 : vector<16x512xf32>
    %106 = arith.addf %99, %105 : vector<16x512xf32>
    %107 = vector.extract_strided_slice %56 {offsets = [128, 0], sizes = [16, 512], strides = [1, 1]} : vector<144x512xf32> to vector<16x512xf32>
    %c495_i32 = arith.constant 495 : i32
    %108 = tpu.dynamic_rotate %107 by %c495_i32 dim 1 : vector<16x512xf32>, i32 -> vector<16x512xf32>
    %c8 = arith.constant 8 : index
    %c0_41 = arith.constant 0 : index
    %c0_42 = arith.constant 0 : index
    %109 = vector.load %arg7[%c8, %c0_41, %c0_42] : memref<9x1x512xf32, #tpu.memory_space<vmem>>, vector<1x1x512xf32>
    %110 = vector.shape_cast %109 : vector<1x1x512xf32> to vector<1x512xf32>
    %111 = vector.broadcast %110 : vector<1x512xf32> to vector<16x512xf32>
    %112 = arith.mulf %108, %111 : vector<16x512xf32>
    %113 = arith.addf %106, %112 : vector<16x512xf32>
    %114 = vector.extract_strided_slice %113 {offsets = [0, 0], sizes = [12, 512], strides = [1, 1]} : vector<16x512xf32> to vector<12x512xf32>
    %c0_43 = arith.constant 0 : index
    %c0_44 = arith.constant 0 : index
    %115 = vector.load %arg8[%c0_43, %c0_44] : memref<36x512xf32, #tpu.memory_space<vmem>>, vector<12x512xf32>
    tpu.vector_store %arg8[%c0_43, %c0_44], %114 {strides = array<i32>} : memref<36x512xf32, #tpu.memory_space<vmem>>, vector<12x512xf32>,
    %c12 = arith.constant 12 : index
    %c0_45 = arith.constant 0 : index
    %116 = vector.load %arg8[%c12, %c0_45] : memref<36x512xf32, #tpu.memory_space<vmem>>, vector<24x512xf32>
    tpu.vector_store %arg8[%c12, %c0_45], %0 {strides = array<i32>} : memref<36x512xf32, #tpu.memory_space<vmem>>, vector<24x512xf32>,
    return
  }
}

</mosaic_0001>

<llo_original>
// kernel: _lambda_.1
$region0: #{_lambda_.1}
  #allocation0 [shape = 'u32[]', space=smem, size = 0x4, offset = 0x4, fixed_abs, tag = 'smem constant byte address 0x4 - core index']
  #allocation1 [shape = 'u32[144,128]{1,0:T(1,128)}', space=vmem, size = 0x12000, scoped, tag = 'internal scratch']
  %s0 = inlined_call_operand.vmem [shape: f32[24,512], index: 0, kind: input, shape index: {}]
  %s1 = inlined_call_operand.vmem [shape: f32[24,1], index: 1, kind: input, shape index: {}]
  %s2 = inlined_call_operand.vmem [shape: f32[24,1], index: 2, kind: input, shape index: {}]
  %s3 = inlined_call_operand.vmem [shape: f32[48,24], index: 3, kind: input, shape index: {}]
  %s4 = inlined_call_operand.vmem [shape: f32[48,1], index: 4, kind: input, shape index: {}]
  %s5 = inlined_call_operand.vmem [shape: f32[48,1], index: 5, kind: input, shape index: {}]
  %s6 = inlined_call_operand.vmem [shape: f32[144,48], index: 6, kind: input, shape index: {}]
  %s7 = inlined_call_operand.vmem [shape: f32[9,1,512], index: 7, kind: input, shape index: {}]
  %s8 = inlined_call_operand.vmem [shape: f32[36,512], index: 8, kind: output, shape index: {}]
  %s9 = sld [smem:[#allocation0]]
  $region42: #{_lambda_.1} parent=0
    _
  %s11 = ssub.s32 1, %s9
  %s12 = scalar_select 0, %s11, %s9
  // Predicated region
  $region2: #{_lambda_.1} parent=0 // pred_check
    _
  $region3: #{_lambda_.1} parent=0 // pred_check_branch
    %14 = sbr.rel (0) target = $region5
  $region4: #{_lambda_.1} parent=0 // pred_region
    _
  $region5: #{_lambda_.1} parent=0 // pred_fallthru
    _
  // Predicated region
  $region6: #{_lambda_.1} parent=0 // pred_check
    _
  $region7: #{_lambda_.1} parent=0 // pred_check_branch
    %16 = sbr.rel (0) target = $region9
  $region8: #{_lambda_.1} parent=0 // pred_region
    _
  $region9: #{_lambda_.1} parent=0 // pred_fallthru
    _
  // Predicated region
  $region10: #{_lambda_.1} parent=0 // pred_check
    _
  $region11: #{_lambda_.1} parent=0 // pred_check_branch
    %18 = sbr.rel (0) target = $region13
  $region12: #{_lambda_.1} parent=0 // pred_region
    _
  $region13: #{_lambda_.1} parent=0 // pred_fallthru
    _
  // Predicated region
  $region14: #{_lambda_.1} parent=0 // pred_check
    _
  $region15: #{_lambda_.1} parent=0 // pred_check_branch
    %20 = sbr.rel (0) target = $region17
  $region16: #{_lambda_.1} parent=0 // pred_region
    _
  $region17: #{_lambda_.1} parent=0 // pred_fallthru
    _
  // Predicated region
  $region18: #{_lambda_.1} parent=0 // pred_check
    _
  $region19: #{_lambda_.1} parent=0 // pred_check_branch
    %22 = sbr.rel (0) target = $region21
  $region20: #{_lambda_.1} parent=0 // pred_region
    _
  $region21: #{_lambda_.1} parent=0 // pred_fallthru
    _
  // Predicated region
  $region22: #{_lambda_.1} parent=0 // pred_check
    _
  $region23: #{_lambda_.1} parent=0 // pred_check_branch
    %24 = sbr.rel (0) target = $region25
  $region24: #{_lambda_.1} parent=0 // pred_region
    _
  $region25: #{_lambda_.1} parent=0 // pred_fallthru
    _
  // Predicated region
  $region26: #{_lambda_.1} parent=0 // pred_check
    _
  $region27: #{_lambda_.1} parent=0 // pred_check_branch
    %26 = sbr.rel (0) target = $region29
  $region28: #{_lambda_.1} parent=0 // pred_region
    _
  $region29: #{_lambda_.1} parent=0 // pred_fallthru
    _
  // Predicated region
  $region30: #{_lambda_.1} parent=0 // pred_check
    _
  $region31: #{_lambda_.1} parent=0 // pred_check_branch
    %28 = sbr.rel (0) target = $region33
  $region32: #{_lambda_.1} parent=0 // pred_region
    _
  $region33: #{_lambda_.1} parent=0 // pred_fallthru
    _
  %v29 = vld [vmem:[%s0] sm:$0xff]
  %v30 = vld [vmem:[%s0 + $0x8] sm:$0xff]
  %v31 = vld [vmem:[%s0 + $0x10] sm:$0xff]
  %v32 = vld [vmem:[%s0 + $0x18] sm:$0xff]
  %v33 = vld [vmem:[%s0 + $0x20] sm:$0xff]
  %v34 = vld [vmem:[%s0 + $0x28] sm:$0xff]
  %v35 = vld [vmem:[%s0 + $0x30] sm:$0xff]
  %v36 = vld [vmem:[%s0 + $0x38] sm:$0xff]
  %v37 = vld [vmem:[%s0 + $0x40] sm:$0xff]
  %v38 = vld [vmem:[%s0 + $0x48] sm:$0xff]
  %v39 = vld [vmem:[%s0 + $0x50] sm:$0xff]
  %v40 = vld [vmem:[%s0 + $0x58] sm:$0xff]
  %v41 = vadd.f32 %v29, %v30
  %v42 = vadd.f32 %v41, %v31
  %v43 = vadd.f32 %v42, %v32
  %44 = vadd.xlane.f32.xlu0 %v43
  %v45 = vpop.xlane.xlu0 %44
  %v46 = vadd.f32 %v33, %v34
  %v47 = vadd.f32 %v46, %v35
  %v48 = vadd.f32 %v47, %v36
  %49 = vadd.xlane.f32.xlu0 %v48
  %v50 = vpop.xlane.xlu0 %49
  %v51 = vadd.f32 %v37, %v38
  %v52 = vadd.f32 %v51, %v39
  %v53 = vadd.f32 %v52, %v40
  %54 = vadd.xlane.f32.xlu0 %v53
  %v55 = vpop.xlane.xlu0 %54
  %v56 = vrcp.pop 512.0
  %v57 = vmul.f32 %v45, %v56
  %v58 = vmul.f32 %v50, %v56
  %v59 = vmul.f32 %v55, %v56
  %v60 = vsub.f32 %v29, %v57
  %v61 = vsub.f32 %v30, %v57
  %v62 = vsub.f32 %v31, %v57
  %v63 = vsub.f32 %v32, %v57
  %v64 = vsub.f32 %v33, %v58
  %v65 = vsub.f32 %v34, %v58
  %v66 = vsub.f32 %v35, %v58
  %v67 = vsub.f32 %v36, %v58
  %v68 = vsub.f32 %v37, %v59
  %v69 = vsub.f32 %v38, %v59
  %v70 = vsub.f32 %v39, %v59
  %v71 = vsub.f32 %v40, %v59
  %v72 = vmul.f32 %v60, %v60
  %v73 = vmul.f32 %v61, %v61
  %v74 = vmul.f32 %v62, %v62
  %v75 = vmul.f32 %v63, %v63
  %v76 = vmul.f32 %v64, %v64
  %v77 = vmul.f32 %v65, %v65
  %v78 = vmul.f32 %v66, %v66
  %v79 = vmul.f32 %v67, %v67
  %v80 = vmul.f32 %v68, %v68
  %v81 = vmul.f32 %v69, %v69
  %v82 = vmul.f32 %v70, %v70
  %v83 = vmul.f32 %v71, %v71
  %v84 = vadd.f32 %v72, %v73
  %v85 = vadd.f32 %v84, %v74
  %v86 = vadd.f32 %v85, %v75
  %87 = vadd.xlane.f32.xlu0 %v86
  %v88 = vpop.xlane.xlu0 %87
  %v89 = vadd.f32 %v76, %v77
  %v90 = vadd.f32 %v89, %v78
  %v91 = vadd.f32 %v90, %v79
  %92 = vadd.xlane.f32.xlu0 %v91
  %v93 = vpop.xlane.xlu0 %92
  %v94 = vadd.f32 %v80, %v81
  %v95 = vadd.f32 %v94, %v82
  %v96 = vadd.f32 %v95, %v83
  %97 = vadd.xlane.f32.xlu0 %v96
  %v98 = vpop.xlane.xlu0 %97
  %v99 = vmul.f32 %v88, %v56
  %v100 = vmul.f32 %v93, %v56
  %v101 = vmul.f32 %v98, %v56
  %v102 = vadd.f32 %v99, 1e-05
  %v103 = vadd.f32 %v100, 1e-05
  %v104 = vadd.f32 %v101, 1e-05
  %v105 = vrsqrt.pop %v102
  %v106 = vrsqrt.pop %v103
  %v107 = vrsqrt.pop %v104
  %v108 = vmul.f32 %v60, %v105
  %v109 = vmul.f32 %v61, %v105
  %v110 = vmul.f32 %v62, %v105
  %v111 = vmul.f32 %v63, %v105
  %v112 = vmul.f32 %v64, %v106
  %v113 = vmul.f32 %v65, %v106
  %v114 = vmul.f32 %v66, %v106
  %v115 = vmul.f32 %v67, %v106
  %v116 = vmul.f32 %v68, %v107
  %v117 = vmul.f32 %v69, %v107
  %v118 = vmul.f32 %v70, %v107
  %v119 = vmul.f32 %v71, %v107
  %v120 = vld [vmem:[%s1] sm:$0xff]
  %v121 = vld [vmem:[%s1 + $0x8] sm:$0xff]
  %v122 = vld [vmem:[%s1 + $0x10] sm:$0xff]
  %124 = vset.pattern.permute.xlu0 0
  %125 = vperm.xlu0 %124, %v120
  %v126 = vpop.permute.xlu0 %125
  %129 = vset.pattern.permute.xlu0 0
  %130 = vperm.xlu0 %129, %v121
  %v131 = vpop.permute.xlu0 %130
  %134 = vset.pattern.permute.xlu0 0
  %135 = vperm.xlu0 %134, %v122
  %v136 = vpop.permute.xlu0 %135
  %v138 = vmul.f32 %v108, %v126
  %v139 = vmul.f32 %v109, %v126
  %v140 = vmul.f32 %v110, %v126
  %v141 = vmul.f32 %v111, %v126
  %v142 = vmul.f32 %v112, %v131
  %v143 = vmul.f32 %v113, %v131
  %v144 = vmul.f32 %v114, %v131
  %v145 = vmul.f32 %v115, %v131
  %v146 = vmul.f32 %v116, %v136
  %v147 = vmul.f32 %v117, %v136
  %v148 = vmul.f32 %v118, %v136
  %v149 = vmul.f32 %v119, %v136
  %v150 = vld [vmem:[%s2] sm:$0xff]
  %v151 = vld [vmem:[%s2 + $0x8] sm:$0xff]
  %v152 = vld [vmem:[%s2 + $0x10] sm:$0xff]
  %154 = vset.pattern.permute.xlu0 0
  %155 = vperm.xlu0 %154, %v150
  %v156 = vpop.permute.xlu0 %155
  %159 = vset.pattern.permute.xlu0 0
  %160 = vperm.xlu0 %159, %v151
  %v161 = vpop.permute.xlu0 %160
  %164 = vset.pattern.permute.xlu0 0
  %165 = vperm.xlu0 %164, %v152
  %v166 = vpop.permute.xlu0 %165
  %v168 = vadd.f32 %v138, %v156
  %v169 = vadd.f32 %v139, %v156
  %v170 = vadd.f32 %v140, %v156
  %v171 = vadd.f32 %v141, %v156
  %v172 = vadd.f32 %v142, %v161
  %v173 = vadd.f32 %v143, %v161
  %v174 = vadd.f32 %v144, %v161
  %v175 = vadd.f32 %v145, %v161
  %v176 = vadd.f32 %v146, %v166
  %v177 = vadd.f32 %v147, %v166
  %v178 = vadd.f32 %v148, %v166
  %v179 = vadd.f32 %v149, %v166
  %v180 = vmax.f32 %v168, 0.0
  %v181 = vmax.f32 %v169, 0.0
  %v182 = vmax.f32 %v170, 0.0
  %v183 = vmax.f32 %v171, 0.0
  %v184 = vmax.f32 %v172, 0.0
  %v185 = vmax.f32 %v173, 0.0
  %v186 = vmax.f32 %v174, 0.0
  %v187 = vmax.f32 %v175, 0.0
  %v188 = vmax.f32 %v176, 0.0
  %v189 = vmax.f32 %v177, 0.0
  %v190 = vmax.f32 %v178, 0.0
  %v191 = vmax.f32 %v179, 0.0
  %v192 = vld [vmem:[%s3] sm:$0xff]
  %v193 = vld [vmem:[%s3 + $0x8] sm:$0xff]
  %v194 = vld [vmem:[%s3 + $0x10] sm:$0xff]
  %v195 = vld [vmem:[%s3 + $0x18] sm:$0xff]
  %v196 = vld [vmem:[%s3 + $0x20] sm:$0xff]
  %v197 = vld [vmem:[%s3 + $0x28] sm:$0xff]
  %vm198 = vcmask 195584
  %v200 = vsel %vm198, %v192, 0
  %v203 = vsel %vm198, %v193, 0
  %v206 = vsel %vm198, %v194, 0
  %v209 = vsel %vm198, %v195, 0
  %v212 = vsel %vm198, %v196, 0
  %v215 = vsel %vm198, %v197, 0
  %217 = vmatprep.subr.mxu0 %v181
  %218 = vmatpush1.msra.mxu0 %v180
  %219 = vmatprep.subr.mxu0 %v185
  %220 = vmatpush1.msra.mxu0 %v184
  %221 = vmatprep.subr.mxu0 %v189
  %222 = vmatpush1.msra.mxu0 %v188
  %223 = vmatprep.subr.mxu0 0.0
  %224 = vmatpush1.msra.mxu0 0.0
  %225 = vmatprep.subr.mxu0 0.0
  %226 = vmatpush1.msra.mxu0 0.0
  %227 = vmatprep.subr.mxu0 0.0
  %228 = vmatpush1.msra.mxu0 0.0
  %229 = vmatprep.subr.mxu0 0.0
  %230 = vmatpush1.msra.mxu0 0.0
  %231 = vmatprep.subr.mxu0 0.0
  %232 = vmatpush1.msra.mxu0 0.0
  %233 = vmatprep.subr.mxu0 0.0
  %234 = vmatpush1.msra.mxu0 0.0
  %235 = vmatprep.subr.mxu0 0.0
  %236 = vmatpush1.msra.mxu0 0.0
  %237 = vmatprep.subr.mxu0 0.0
  %238 = vmatpush1.msra.mxu0 0.0
  %239 = vmatprep.subr.mxu0 0.0
  %240 = vmatpush1.msra.mxu0 0.0
  %241 = vmatprep.subr.mxu0 0.0
  %242 = vmatpush1.msra.mxu0 0.0
  %243 = vmatprep.subr.mxu0 0.0
  %244 = vmatpush1.msra.mxu0 0.0
  %245 = vmatprep.subr.mxu0 0.0
  %246 = vmatpush1.msra.mxu0 0.0
  %247 = vmatprep.subr.mxu0 0.0
  %248 = vmatpush1.msra.mxu0 0.0
  %249 = vmatprep.subr.mxu0 0.0
  %250 = vmatpush1.msra.mxu0 0.0
  %251 = vmatprep.subr.mxu0 0.0
  %252 = vmatpush1.msra.mxu0 0.0
  %253 = vmatprep.subr.mxu0 0.0
  %254 = vmatpush1.msra.mxu0 0.0
  %255 = vmatprep.subr.mxu0 0.0
  %256 = vmatpush1.msra.mxu0 0.0
  %257 = vmatprep.subr.mxu0 0.0
  %258 = vmatpush1.msra.mxu0 0.0
  %259 = vmatprep.subr.mxu0 0.0
  %260 = vmatpush1.msra.mxu0 0.0
  %261 = vmatprep.subr.mxu0 0.0
  %262 = vmatpush1.msra.mxu0 0.0
  %263 = vmatprep.subr.mxu0 0.0
  %264 = vmatpush1.msra.mxu0 0.0
  %265 = vmatprep.subr.mxu0 0.0
  %266 = vmatpush1.msra.mxu0 0.0
  %267 = vmatprep.subr.mxu0 0.0
  %268 = vmatpush1.msra.mxu0 0.0
  %269 = vmatprep.subr.mxu0 0.0
  %270 = vmatpush1.msra.mxu0 0.0
  %271 = vmatprep.subr.mxu0 0.0
  %272 = vmatpush1.msra.mxu0 0.0
  %273 = vmatprep.subr.mxu0 0.0
  %274 = vmatpush1.msra.mxu0 0.0
  %275 = vmatprep.subr.mxu0 0.0
  %276 = vmatpush1.msra.mxu0 0.0
  %277 = vmatprep.subr.mxu0 0.0
  %278 = vmatpush1.msra.mxu0 0.0
  %279 = vmatprep.subr.mxu0 0.0
  %280 = vmatpush1.msra.mxu0 0.0
  %281 = vmatprep.mubr.f32.mxu0 0.0
  %282 = vmatmul.mubr.f32.gmra.mrb[0].mxu0 %v200
  %v283 = vpop.f32.mrb[0].mxu0
  %v284 = vadd.f32 0.0, %v283
  %v285 = vpop.f32.mrb[0].mxu0
  %v286 = vadd.f32 0.0, %v285
  %287 = vmatprep.mubr.f32.mxu0 0.0
  %288 = vmatmul.mubr.f32.gmra.mrb[0].mxu0 %v203
  %v289 = vpop.f32.mrb[0].mxu0
  %v290 = vadd.f32 0.0, %v289
  %v291 = vpop.f32.mrb[0].mxu0
  %v292 = vadd.f32 0.0, %v291
  %293 = vmatprep.mubr.f32.mxu0 0.0
  %294 = vmatmul.mubr.f32.gmra.mrb[0].mxu0 %v206
  %v295 = vpop.f32.mrb[0].mxu0
  %v296 = vadd.f32 0.0, %v295
  %v297 = vpop.f32.mrb[0].mxu0
  %v298 = vadd.f32 0.0, %v297
  %299 = vmatprep.mubr.f32.mxu0 0.0
  %300 = vmatmul.mubr.f32.gmra.mrb[0].mxu0 %v209
  %v301 = vpop.f32.mrb[0].mxu0
  %v302 = vadd.f32 0.0, %v301
  %v303 = vpop.f32.mrb[0].mxu0
  %v304 = vadd.f32 0.0, %v303
  %305 = vmatprep.mubr.f32.mxu0 0.0
  %306 = vmatmul.mubr.f32.gmra.mrb[0].mxu0 %v212
  %v307 = vpop.f32.mrb[0].mxu0
  %v308 = vadd.f32 0.0, %v307
  %v309 = vpop.f32.mrb[0].mxu0
  %v310 = vadd.f32 0.0, %v309
  %311 = vmatprep.mubr.f32.mxu0 0.0
  %312 = vmatmul.mubr.f32.gmra.mrb[0].mxu0 %v215
  %v313 = vpop.f32.mrb[0].mxu0
  %v314 = vadd.f32 0.0, %v313
  %v315 = vpop.f32.mrb[0].mxu0
  %v316 = vadd.f32 0.0, %v315
  %317 = vdwg.mxu0
  %318 = vmatprep.subr.mxu0 %v183
  %319 = vmatpush1.msra.mxu0 %v182
  %320 = vmatprep.subr.mxu0 %v187
  %321 = vmatpush1.msra.mxu0 %v186
  %322 = vmatprep.subr.mxu0 %v191
  %323 = vmatpush1.msra.mxu0 %v190
  %324 = vmatprep.subr.mxu0 0.0
  %325 = vmatpush1.msra.mxu0 0.0
  %326 = vmatprep.subr.mxu0 0.0
  %327 = vmatpush1.msra.mxu0 0.0
  %328 = vmatprep.subr.mxu0 0.0
  %329 = vmatpush1.msra.mxu0 0.0
  %330 = vmatprep.subr.mxu0 0.0
  %331 = vmatpush1.msra.mxu0 0.0
  %332 = vmatprep.subr.mxu0 0.0
  %333 = vmatpush1.msra.mxu0 0.0
  %334 = vmatprep.subr.mxu0 0.0
  %335 = vmatpush1.msra.mxu0 0.0
  %336 = vmatprep.subr.mxu0 0.0
  %337 = vmatpush1.msra.mxu0 0.0
  %338 = vmatprep.subr.mxu0 0.0
  %339 = vmatpush1.msra.mxu0 0.0
  %340 = vmatprep.subr.mxu0 0.0
  %341 = vmatpush1.msra.mxu0 0.0
  %342 = vmatprep.subr.mxu0 0.0
  %343 = vmatpush1.msra.mxu0 0.0
  %344 = vmatprep.subr.mxu0 0.0
  %345 = vmatpush1.msra.mxu0 0.0
  %346 = vmatprep.subr.mxu0 0.0
  %347 = vmatpush1.msra.mxu0 0.0
  %348 = vmatprep.subr.mxu0 0.0
  %349 = vmatpush1.msra.mxu0 0.0
  %350 = vmatprep.subr.mxu0 0.0
  %351 = vmatpush1.msra.mxu0 0.0
  %352 = vmatprep.subr.mxu0 0.0
  %353 = vmatpush1.msra.mxu0 0.0
  %354 = vmatprep.subr.mxu0 0.0
  %355 = vmatpush1.msra.mxu0 0.0
  %356 = vmatprep.subr.mxu0 0.0
  %357 = vmatpush1.msra.mxu0 0.0
  %358 = vmatprep.subr.mxu0 0.0
  %359 = vmatpush1.msra.mxu0 0.0
  %360 = vmatprep.subr.mxu0 0.0
  %361 = vmatpush1.msra.mxu0 0.0
  %362 = vmatprep.subr.mxu0 0.0
  %363 = vmatpush1.msra.mxu0 0.0
  %364 = vmatprep.subr.mxu0 0.0
  %365 = vmatpush1.msra.mxu0 0.0
  %366 = vmatprep.subr.mxu0 0.0
  %367 = vmatpush1.msra.mxu0 0.0
  %368 = vmatprep.subr.mxu0 0.0
  %369 = vmatpush1.msra.mxu0 0.0
  %370 = vmatprep.subr.mxu0 0.0
  %371 = vmatpush1.msra.mxu0 0.0
  %372 = vmatprep.subr.mxu0 0.0
  %373 = vmatpush1.msra.mxu0 0.0
  %374 = vmatprep.subr.mxu0 0.0
  %375 = vmatpush1.msra.mxu0 0.0
  %376 = vmatprep.subr.mxu0 0.0
  %377 = vmatpush1.msra.mxu0 0.0
  %378 = vmatprep.subr.mxu0 0.0
  %379 = vmatpush1.msra.mxu0 0.0
  %380 = vmatprep.subr.mxu0 0.0
  %381 = vmatpush1.msra.mxu0 0.0
  %382 = vmatprep.mubr.f32.mxu0 0.0
  %383 = vmatmul.mubr.f32.gmra.mrb[0].mxu0 %v200
  %v384 = vpop.f32.mrb[0].mxu0
  %v385 = vadd.f32 0.0, %v384
  %v386 = vpop.f32.mrb[0].mxu0
  %v387 = vadd.f32 0.0, %v386
  %388 = vmatprep.mubr.f32.mxu0 0.0
  %389 = vmatmul.mubr.f32.gmra.mrb[0].mxu0 %v203
  %v390 = vpop.f32.mrb[0].mxu0
  %v391 = vadd.f32 0.0, %v390
  %v392 = vpop.f32.mrb[0].mxu0
  %v393 = vadd.f32 0.0, %v392
  %394 = vmatprep.mubr.f32.mxu0 0.0
  %395 = vmatmul.mubr.f32.gmra.mrb[0].mxu0 %v206
  %v396 = vpop.f32.mrb[0].mxu0
  %v397 = vadd.f32 0.0, %v396
  %v398 = vpop.f32.mrb[0].mxu0
  %v399 = vadd.f32 0.0, %v398
  %400 = vmatprep.mubr.f32.mxu0 0.0
  %401 = vmatmul.mubr.f32.gmra.mrb[0].mxu0 %v209
  %v402 = vpop.f32.mrb[0].mxu0
  %v403 = vadd.f32 0.0, %v402
  %v404 = vpop.f32.mrb[0].mxu0
  %v405 = vadd.f32 0.0, %v404
  %406 = vmatprep.mubr.f32.mxu0 0.0
  %407 = vmatmul.mubr.f32.gmra.mrb[0].mxu0 %v212
  %v408 = vpop.f32.mrb[0].mxu0
  %v409 = vadd.f32 0.0, %v408
  %v410 = vpop.f32.mrb[0].mxu0
  %v411 = vadd.f32 0.0, %v410
  %412 = vmatprep.mubr.f32.mxu0 0.0
  %413 = vmatmul.mubr.f32.gmra.mrb[0].mxu0 %v215
  %v414 = vpop.f32.mrb[0].mxu0
  %v415 = vadd.f32 0.0, %v414
  %v416 = vpop.f32.mrb[0].mxu0
  %v417 = vadd.f32 0.0, %v416
  %418 = vdwg.mxu0
  %v419 = vadd.f32 %v284, %v286
  %v420 = vadd.f32 %v419, %v385
  %v421 = vadd.f32 %v420, %v387
  %422 = vadd.xlane.f32.xlu0 %v421
  %v423 = vpop.xlane.xlu0 %422
  %v424 = vadd.f32 %v290, %v292
  %v425 = vadd.f32 %v424, %v391
  %v426 = vadd.f32 %v425, %v393
  %427 = vadd.xlane.f32.xlu0 %v426
  %v428 = vpop.xlane.xlu0 %427
  %v429 = vadd.f32 %v296, %v298
  %v430 = vadd.f32 %v429, %v397
  %v431 = vadd.f32 %v430, %v399
  %432 = vadd.xlane.f32.xlu0 %v431
  %v433 = vpop.xlane.xlu0 %432
  %v434 = vadd.f32 %v302, %v304
  %v435 = vadd.f32 %v434, %v403
  %v436 = vadd.f32 %v435, %v405
  %437 = vadd.xlane.f32.xlu0 %v436
  %v438 = vpop.xlane.xlu0 %437
  %v439 = vadd.f32 %v308, %v310
  %v440 = vadd.f32 %v439, %v409
  %v441 = vadd.f32 %v440, %v411
  %442 = vadd.xlane.f32.xlu0 %v441
  %v443 = vpop.xlane.xlu0 %442
  %v444 = vadd.f32 %v314, %v316
  %v445 = vadd.f32 %v444, %v415
  %v446 = vadd.f32 %v445, %v417
  %447 = vadd.xlane.f32.xlu0 %v446
  %v448 = vpop.xlane.xlu0 %447
  %v449 = vmul.f32 %v423, %v56
  %v450 = vmul.f32 %v428, %v56
  %v451 = vmul.f32 %v433, %v56
  %v452 = vmul.f32 %v438, %v56
  %v453 = vmul.f32 %v443, %v56
  %v454 = vmul.f32 %v448, %v56
  %v455 = vsub.f32 %v284, %v449
  %v456 = vsub.f32 %v286, %v449
  %v457 = vsub.f32 %v385, %v449
  %v458 = vsub.f32 %v387, %v449
  %v459 = vsub.f32 %v290, %v450
  %v460 = vsub.f32 %v292, %v450
  %v461 = vsub.f32 %v391, %v450
  %v462 = vsub.f32 %v393, %v450
  %v463 = vsub.f32 %v296, %v451
  %v464 = vsub.f32 %v298, %v451
  %v465 = vsub.f32 %v397, %v451
  %v466 = vsub.f32 %v399, %v451
  %v467 = vsub.f32 %v302, %v452
  %v468 = vsub.f32 %v304, %v452
  %v469 = vsub.f32 %v403, %v452
  %v470 = vsub.f32 %v405, %v452
  %v471 = vsub.f32 %v308, %v453
  %v472 = vsub.f32 %v310, %v453
  %v473 = vsub.f32 %v409, %v453
  %v474 = vsub.f32 %v411, %v453
  %v475 = vsub.f32 %v314, %v454
  %v476 = vsub.f32 %v316, %v454
  %v477 = vsub.f32 %v415, %v454
  %v478 = vsub.f32 %v417, %v454
  %v479 = vmul.f32 %v455, %v455
  %v480 = vmul.f32 %v456, %v456
  %v481 = vmul.f32 %v457, %v457
  %v482 = vmul.f32 %v458, %v458
  %v483 = vmul.f32 %v459, %v459
  %v484 = vmul.f32 %v460, %v460
  %v485 = vmul.f32 %v461, %v461
  %v486 = vmul.f32 %v462, %v462
  %v487 = vmul.f32 %v463, %v463
  %v488 = vmul.f32 %v464, %v464
  %v489 = vmul.f32 %v465, %v465
  %v490 = vmul.f32 %v466, %v466
  %v491 = vmul.f32 %v467, %v467
  %v492 = vmul.f32 %v468, %v468
  %v493 = vmul.f32 %v469, %v469
  %v494 = vmul.f32 %v470, %v470
  %v495 = vmul.f32 %v471, %v471
  %v496 = vmul.f32 %v472, %v472
  %v497 = vmul.f32 %v473, %v473
  %v498 = vmul.f32 %v474, %v474
  %v499 = vmul.f32 %v475, %v475
  %v500 = vmul.f32 %v476, %v476
  %v501 = vmul.f32 %v477, %v477
  %v502 = vmul.f32 %v478, %v478
  %v503 = vadd.f32 %v479, %v480
  %v504 = vadd.f32 %v503, %v481
  %v505 = vadd.f32 %v504, %v482
  %506 = vadd.xlane.f32.xlu0 %v505
  %v507 = vpop.xlane.xlu0 %506
  %v508 = vadd.f32 %v483, %v484
  %v509 = vadd.f32 %v508, %v485
  %v510 = vadd.f32 %v509, %v486
  %511 = vadd.xlane.f32.xlu0 %v510
  %v512 = vpop.xlane.xlu0 %511
  %v513 = vadd.f32 %v487, %v488
  %v514 = vadd.f32 %v513, %v489
  %v515 = vadd.f32 %v514, %v490
  %516 = vadd.xlane.f32.xlu0 %v515
  %v517 = vpop.xlane.xlu0 %516
  %v518 = vadd.f32 %v491, %v492
  %v519 = vadd.f32 %v518, %v493
  %v520 = vadd.f32 %v519, %v494
  %521 = vadd.xlane.f32.xlu0 %v520
  %v522 = vpop.xlane.xlu0 %521
  %v523 = vadd.f32 %v495, %v496
  %v524 = vadd.f32 %v523, %v497
  %v525 = vadd.f32 %v524, %v498
  %526 = vadd.xlane.f32.xlu0 %v525
  %v527 = vpop.xlane.xlu0 %526
  %v528 = vadd.f32 %v499, %v500
  %v529 = vadd.f32 %v528, %v501
  %v530 = vadd.f32 %v529, %v502
  %531 = vadd.xlane.f32.xlu0 %v530
  %v532 = vpop.xlane.xlu0 %531
  %v533 = vmul.f32 %v507, %v56
  %v534 = vmul.f32 %v512, %v56
  %v535 = vmul.f32 %v517, %v56
  %v536 = vmul.f32 %v522, %v56
  %v537 = vmul.f32 %v527, %v56
  %v538 = vmul.f32 %v532, %v56
  %v539 = vadd.f32 %v533, 1e-05
  %v540 = vadd.f32 %v534, 1e-05
  %v541 = vadd.f32 %v535, 1e-05
  %v542 = vadd.f32 %v536, 1e-05
  %v543 = vadd.f32 %v537, 1e-05
  %v544 = vadd.f32 %v538, 1e-05
  %v545 = vrsqrt.pop %v539
  %v546 = vrsqrt.pop %v540
  %v547 = vrsqrt.pop %v541
  %v548 = vrsqrt.pop %v542
  %v549 = vrsqrt.pop %v543
  %v550 = vrsqrt.pop %v544
  %v551 = vmul.f32 %v455, %v545
  %v552 = vmul.f32 %v456, %v545
  %v553 = vmul.f32 %v457, %v545
  %v554 = vmul.f32 %v458, %v545
  %v555 = vmul.f32 %v459, %v546
  %v556 = vmul.f32 %v460, %v546
  %v557 = vmul.f32 %v461, %v546
  %v558 = vmul.f32 %v462, %v546
  %v559 = vmul.f32 %v463, %v547
  %v560 = vmul.f32 %v464, %v547
  %v561 = vmul.f32 %v465, %v547
  %v562 = vmul.f32 %v466, %v547
  %v563 = vmul.f32 %v467, %v548
  %v564 = vmul.f32 %v468, %v548
  %v565 = vmul.f32 %v469, %v548
  %v566 = vmul.f32 %v470, %v548
  %v567 = vmul.f32 %v471, %v549
  %v568 = vmul.f32 %v472, %v549
  %v569 = vmul.f32 %v473, %v549
  %v570 = vmul.f32 %v474, %v549
  %v571 = vmul.f32 %v475, %v550
  %v572 = vmul.f32 %v476, %v550
  %v573 = vmul.f32 %v477, %v550
  %v574 = vmul.f32 %v478, %v550
  %v575 = vld [vmem:[%s4] sm:$0xff]
  %v576 = vld [vmem:[%s4 + $0x8] sm:$0xff]
  %v577 = vld [vmem:[%s4 + $0x10] sm:$0xff]
  %v578 = vld [vmem:[%s4 + $0x18] sm:$0xff]
  %v579 = vld [vmem:[%s4 + $0x20] sm:$0xff]
  %v580 = vld [vmem:[%s4 + $0x28] sm:$0xff]
  %582 = vset.pattern.permute.xlu0 0
  %583 = vperm.xlu0 %582, %v575
  %v584 = vpop.permute.xlu0 %583
  %587 = vset.pattern.permute.xlu0 0
  %588 = vperm.xlu0 %587, %v576
  %v589 = vpop.permute.xlu0 %588
  %592 = vset.pattern.permute.xlu0 0
  %593 = vperm.xlu0 %592, %v577
  %v594 = vpop.permute.xlu0 %593
  %597 = vset.pattern.permute.xlu0 0
  %598 = vperm.xlu0 %597, %v578
  %v599 = vpop.permute.xlu0 %598
  %602 = vset.pattern.permute.xlu0 0
  %603 = vperm.xlu0 %602, %v579
  %v604 = vpop.permute.xlu0 %603
  %607 = vset.pattern.permute.xlu0 0
  %608 = vperm.xlu0 %607, %v580
  %v609 = vpop.permute.xlu0 %608
  %v611 = vmul.f32 %v551, %v584
  %v612 = vmul.f32 %v552, %v584
  %v613 = vmul.f32 %v553, %v584
  %v614 = vmul.f32 %v554, %v584
  %v615 = vmul.f32 %v555, %v589
  %v616 = vmul.f32 %v556, %v589
  %v617 = vmul.f32 %v557, %v589
  %v618 = vmul.f32 %v558, %v589
  %v619 = vmul.f32 %v559, %v594
  %v620 = vmul.f32 %v560, %v594
  %v621 = vmul.f32 %v561, %v594
  %v622 = vmul.f32 %v562, %v594
  %v623 = vmul.f32 %v563, %v599
  %v624 = vmul.f32 %v564, %v599
  %v625 = vmul.f32 %v565, %v599
  %v626 = vmul.f32 %v566, %v599
  %v627 = vmul.f32 %v567, %v604
  %v628 = vmul.f32 %v568, %v604
  %v629 = vmul.f32 %v569, %v604
  %v630 = vmul.f32 %v570, %v604
  %v631 = vmul.f32 %v571, %v609
  %v632 = vmul.f32 %v572, %v609
  %v633 = vmul.f32 %v573, %v609
  %v634 = vmul.f32 %v574, %v609
  %v635 = vld [vmem:[%s5] sm:$0xff]
  %v636 = vld [vmem:[%s5 + $0x8] sm:$0xff]
  %v637 = vld [vmem:[%s5 + $0x10] sm:$0xff]
  %v638 = vld [vmem:[%s5 + $0x18] sm:$0xff]
  %v639 = vld [vmem:[%s5 + $0x20] sm:$0xff]
  %v640 = vld [vmem:[%s5 + $0x28] sm:$0xff]
  %642 = vset.pattern.permute.xlu0 0
  %643 = vperm.xlu0 %642, %v635
  %v644 = vpop.permute.xlu0 %643
  %647 = vset.pattern.permute.xlu0 0
  %648 = vperm.xlu0 %647, %v636
  %v649 = vpop.permute.xlu0 %648
  %652 = vset.pattern.permute.xlu0 0
  %653 = vperm.xlu0 %652, %v637
  %v654 = vpop.permute.xlu0 %653
  %657 = vset.pattern.permute.xlu0 0
  %658 = vperm.xlu0 %657, %v638
  %v659 = vpop.permute.xlu0 %658
  %662 = vset.pattern.permute.xlu0 0
  %663 = vperm.xlu0 %662, %v639
  %v664 = vpop.permute.xlu0 %663
  %667 = vset.pattern.permute.xlu0 0
  %668 = vperm.xlu0 %667, %v640
  %v669 = vpop.permute.xlu0 %668
  %v671 = vadd.f32 %v611, %v644
  %v672 = vadd.f32 %v612, %v644
  %v673 = vadd.f32 %v613, %v644
  %v674 = vadd.f32 %v614, %v644
  %v675 = vadd.f32 %v615, %v649
  %v676 = vadd.f32 %v616, %v649
  %v677 = vadd.f32 %v617, %v649
  %v678 = vadd.f32 %v618, %v649
  %v679 = vadd.f32 %v619, %v654
  %v680 = vadd.f32 %v620, %v654
  %v681 = vadd.f32 %v621, %v654
  %v682 = vadd.f32 %v622, %v654
  %v683 = vadd.f32 %v623, %v659
  %v684 = vadd.f32 %v624, %v659
  %v685 = vadd.f32 %v625, %v659
  %v686 = vadd.f32 %v626, %v659
  %v687 = vadd.f32 %v627, %v664
  %v688 = vadd.f32 %v628, %v664
  %v689 = vadd.f32 %v629, %v664
  %v690 = vadd.f32 %v630, %v664
  %v691 = vadd.f32 %v631, %v669
  %v692 = vadd.f32 %v632, %v669
  %v693 = vadd.f32 %v633, %v669
  %v694 = vadd.f32 %v634, %v669
  %v695 = vmax.f32 %v671, 0.0
  %v696 = vmax.f32 %v672, 0.0
  %v697 = vmax.f32 %v673, 0.0
  %v698 = vmax.f32 %v674, 0.0
  %v699 = vmax.f32 %v675, 0.0
  %v700 = vmax.f32 %v676, 0.0
  %v701 = vmax.f32 %v677, 0.0
  %v702 = vmax.f32 %v678, 0.0
  %v703 = vmax.f32 %v679, 0.0
  %v704 = vmax.f32 %v680, 0.0
  %v705 = vmax.f32 %v681, 0.0
  %v706 = vmax.f32 %v682, 0.0
  %v707 = vmax.f32 %v683, 0.0
  %v708 = vmax.f32 %v684, 0.0
  %v709 = vmax.f32 %v685, 0.0
  %v710 = vmax.f32 %v686, 0.0
  %v711 = vmax.f32 %v687, 0.0
  %v712 = vmax.f32 %v688, 0.0
  %v713 = vmax.f32 %v689, 0.0
  %v714 = vmax.f32 %v690, 0.0
  %v715 = vmax.f32 %v691, 0.0
  %v716 = vmax.f32 %v692, 0.0
  %v717 = vmax.f32 %v693, 0.0
  %v718 = vmax.f32 %v694, 0.0
  %v719 = vld [vmem:[%s6] sm:$0xff]
  %v720 = vld [vmem:[%s6 + $0x8] sm:$0xff]
  %v721 = vld [vmem:[%s6 + $0x10] sm:$0xff]
  %v722 = vld [vmem:[%s6 + $0x18] sm:$0xff]
  %v723 = vld [vmem:[%s6 + $0x20] sm:$0xff]
  %v724 = vld [vmem:[%s6 + $0x28] sm:$0xff]
  %v725 = vld [vmem:[%s6 + $0x30] sm:$0xff]
  %v726 = vld [vmem:[%s6 + $0x38] sm:$0xff]
  %v727 = vld [vmem:[%s6 + $0x40] sm:$0xff]
  %v728 = vld [vmem:[%s6 + $0x48] sm:$0xff]
  %v729 = vld [vmem:[%s6 + $0x50] sm:$0xff]
  %v730 = vld [vmem:[%s6 + $0x58] sm:$0xff]
  %v731 = vld [vmem:[%s6 + $0x60] sm:$0xff]
  %v732 = vld [vmem:[%s6 + $0x68] sm:$0xff]
  %v733 = vld [vmem:[%s6 + $0x70] sm:$0xff]
  %v734 = vld [vmem:[%s6 + $0x78] sm:$0xff]
  %v735 = vld [vmem:[%s6 + $0x80] sm:$0xff]
  %v736 = vld [vmem:[%s6 + $0x88] sm:$0xff]
  %vm737 = vcmask 392192
  %v739 = vsel %vm737, %v719, 0
  %v742 = vsel %vm737, %v720, 0
  %v745 = vsel %vm737, %v721, 0
  %v748 = vsel %vm737, %v722, 0
  %v751 = vsel %vm737, %v723, 0
  %v754 = vsel %vm737, %v724, 0
  %v757 = vsel %vm737, %v725, 0
  %v760 = vsel %vm737, %v726, 0
  %v763 = vsel %vm737, %v727, 0
  %v766 = vsel %vm737, %v728, 0
  %v769 = vsel %vm737, %v729, 0
  %v772 = vsel %vm737, %v730, 0
  %v775 = vsel %vm737, %v731, 0
  %v778 = vsel %vm737, %v732, 0
  %v781 = vsel %vm737, %v733, 0
  %v784 = vsel %vm737, %v734, 0
  %v787 = vsel %vm737, %v735, 0
  %v790 = vsel %vm737, %v736, 0
  %792 = vmatprep.subr.mxu0 %v696
  %793 = vmatpush1.msra.mxu0 %v695
  %794 = vmatprep.subr.mxu0 %v700
  %795 = vmatpush1.msra.mxu0 %v699
  %796 = vmatprep.subr.mxu0 %v704
  %797 = vmatpush1.msra.mxu0 %v703
  %798 = vmatprep.subr.mxu0 %v708
  %799 = vmatpush1.msra.mxu0 %v707
  %800 = vmatprep.subr.mxu0 %v712
  %801 = vmatpush1.msra.mxu0 %v711
  %802 = vmatprep.subr.mxu0 %v716
  %803 = vmatpush1.msra.mxu0 %v715
  %804 = vmatprep.subr.mxu0 0.0
  %805 = vmatpush1.msra.mxu0 0.0
  %806 = vmatprep.subr.mxu0 0.0
  %807 = vmatpush1.msra.mxu0 0.0
  %808 = vmatprep.subr.mxu0 0.0
  %809 = vmatpush1.msra.mxu0 0.0
  %810 = vmatprep.subr.mxu0 0.0
  %811 = vmatpush1.msra.mxu0 0.0
  %812 = vmatprep.subr.mxu0 0.0
  %813 = vmatpush1.msra.mxu0 0.0
  %814 = vmatprep.subr.mxu0 0.0
  %815 = vmatpush1.msra.mxu0 0.0
  %816 = vmatprep.subr.mxu0 0.0
  %817 = vmatpush1.msra.mxu0 0.0
  %818 = vmatprep.subr.mxu0 0.0
  %819 = vmatpush1.msra.mxu0 0.0
  %820 = vmatprep.subr.mxu0 0.0
  %821 = vmatpush1.msra.mxu0 0.0
  %822 = vmatprep.subr.mxu0 0.0
  %823 = vmatpush1.msra.mxu0 0.0
  %824 = vmatprep.subr.mxu0 0.0
  %825 = vmatpush1.msra.mxu0 0.0
  %826 = vmatprep.subr.mxu0 0.0
  %827 = vmatpush1.msra.mxu0 0.0
  %828 = vmatprep.subr.mxu0 0.0
  %829 = vmatpush1.msra.mxu0 0.0
  %830 = vmatprep.subr.mxu0 0.0
  %831 = vmatpush1.msra.mxu0 0.0
  %832 = vmatprep.subr.mxu0 0.0
  %833 = vmatpush1.msra.mxu0 0.0
  %834 = vmatprep.subr.mxu0 0.0
  %835 = vmatpush1.msra.mxu0 0.0
  %836 = vmatprep.subr.mxu0 0.0
  %837 = vmatpush1.msra.mxu0 0.0
  %838 = vmatprep.subr.mxu0 0.0
  %839 = vmatpush1.msra.mxu0 0.0
  %840 = vmatprep.subr.mxu0 0.0
  %841 = vmatpush1.msra.mxu0 0.0
  %842 = vmatprep.subr.mxu0 0.0
  %843 = vmatpush1.msra.mxu0 0.0
  %844 = vmatprep.subr.mxu0 0.0
  %845 = vmatpush1.msra.mxu0 0.0
  %846 = vmatprep.subr.mxu0 0.0
  %847 = vmatpush1.msra.mxu0 0.0
  %848 = vmatprep.subr.mxu0 0.0
  %849 = vmatpush1.msra.mxu0 0.0
  %850 = vmatprep.subr.mxu0 0.0
  %851 = vmatpush1.msra.mxu0 0.0
  %852 = vmatprep.subr.mxu0 0.0
  %853 = vmatpush1.msra.mxu0 0.0
  %854 = vmatprep.subr.mxu0 0.0
  %855 = vmatpush1.msra.mxu0 0.0
  %856 = vmatprep.mubr.f32.mxu0 0.0
  %857 = vmatmul.mubr.f32.gmra.mrb[0].mxu0 %v739
  %v858 = vpop.f32.mrb[0].mxu0
  %v859 = vadd.f32 0.0, %v858
  %v860 = vpop.f32.mrb[0].mxu0
  %v861 = vadd.f32 0.0, %v860
  %862 = vmatprep.mubr.f32.mxu0 0.0
  %863 = vmatmul.mubr.f32.gmra.mrb[0].mxu0 %v742
  %v864 = vpop.f32.mrb[0].mxu0
  %v865 = vadd.f32 0.0, %v864
  %v866 = vpop.f32.mrb[0].mxu0
  %v867 = vadd.f32 0.0, %v866
  %868 = vmatprep.mubr.f32.mxu0 0.0
  %869 = vmatmul.mubr.f32.gmra.mrb[0].mxu0 %v745
  %v870 = vpop.f32.mrb[0].mxu0
  %v871 = vadd.f32 0.0, %v870
  %v872 = vpop.f32.mrb[0].mxu0
  %v873 = vadd.f32 0.0, %v872
  %874 = vmatprep.mubr.f32.mxu0 0.0
  %875 = vmatmul.mubr.f32.gmra.mrb[0].mxu0 %v748
  %v876 = vpop.f32.mrb[0].mxu0
  %v877 = vadd.f32 0.0, %v876
  %v878 = vpop.f32.mrb[0].mxu0
  %v879 = vadd.f32 0.0, %v878
  %880 = vmatprep.mubr.f32.mxu0 0.0
  %881 = vmatmul.mubr.f32.gmra.mrb[0].mxu0 %v751
  %v882 = vpop.f32.mrb[0].mxu0
  %v883 = vadd.f32 0.0, %v882
  %v884 = vpop.f32.mrb[0].mxu0
  %v885 = vadd.f32 0.0, %v884
  %886 = vmatprep.mubr.f32.mxu0 0.0
  %887 = vmatmul.mubr.f32.gmra.mrb[0].mxu0 %v754
  %v888 = vpop.f32.mrb[0].mxu0
  %v889 = vadd.f32 0.0, %v888
  %v890 = vpop.f32.mrb[0].mxu0
  %v891 = vadd.f32 0.0, %v890
  %892 = vmatprep.mubr.f32.mxu0 0.0
  %893 = vmatmul.mubr.f32.gmra.mrb[0].mxu0 %v757
  %v894 = vpop.f32.mrb[0].mxu0
  %v895 = vadd.f32 0.0, %v894
  %v896 = vpop.f32.mrb[0].mxu0
  %v897 = vadd.f32 0.0, %v896
  %898 = vmatprep.mubr.f32.mxu0 0.0
  %899 = vmatmul.mubr.f32.gmra.mrb[0].mxu0 %v760
  %v900 = vpop.f32.mrb[0].mxu0
  %v901 = vadd.f32 0.0, %v900
  %v902 = vpop.f32.mrb[0].mxu0
  %v903 = vadd.f32 0.0, %v902
  %904 = vmatprep.mubr.f32.mxu0 0.0
  %905 = vmatmul.mubr.f32.gmra.mrb[0].mxu0 %v763
  %v906 = vpop.f32.mrb[0].mxu0
  %v907 = vadd.f32 0.0, %v906
  %v908 = vpop.f32.mrb[0].mxu0
  %v909 = vadd.f32 0.0, %v908
  %910 = vmatprep.mubr.f32.mxu0 0.0
  %911 = vmatmul.mubr.f32.gmra.mrb[0].mxu0 %v766
  %v912 = vpop.f32.mrb[0].mxu0
  %v913 = vadd.f32 0.0, %v912
  %v914 = vpop.f32.mrb[0].mxu0
  %v915 = vadd.f32 0.0, %v914
  %916 = vmatprep.mubr.f32.mxu0 0.0
  %917 = vmatmul.mubr.f32.gmra.mrb[0].mxu0 %v769
  %v918 = vpop.f32.mrb[0].mxu0
  %v919 = vadd.f32 0.0, %v918
  %v920 = vpop.f32.mrb[0].mxu0
  %v921 = vadd.f32 0.0, %v920
  %922 = vmatprep.mubr.f32.mxu0 0.0
  %923 = vmatmul.mubr.f32.gmra.mrb[0].mxu0 %v772
  %v924 = vpop.f32.mrb[0].mxu0
  %v925 = vadd.f32 0.0, %v924
  %v926 = vpop.f32.mrb[0].mxu0
  %v927 = vadd.f32 0.0, %v926
  %928 = vmatprep.mubr.f32.mxu0 0.0
  %929 = vmatmul.mubr.f32.gmra.mrb[0].mxu0 %v775
  %v930 = vpop.f32.mrb[0].mxu0
  %v931 = vadd.f32 0.0, %v930
  %v932 = vpop.f32.mrb[0].mxu0
  %v933 = vadd.f32 0.0, %v932
  %934 = vmatprep.mubr.f32.mxu0 0.0
  %935 = vmatmul.mubr.f32.gmra.mrb[0].mxu0 %v778
  %v936 = vpop.f32.mrb[0].mxu0
  %v937 = vadd.f32 0.0, %v936
  %v938 = vpop.f32.mrb[0].mxu0
  %v939 = vadd.f32 0.0, %v938
  %940 = vmatprep.mubr.f32.mxu0 0.0
  %941 = vmatmul.mubr.f32.gmra.mrb[0].mxu0 %v781
  %v942 = vpop.f32.mrb[0].mxu0
  %v943 = vadd.f32 0.0, %v942
  %v944 = vpop.f32.mrb[0].mxu0
  %v945 = vadd.f32 0.0, %v944
  %946 = vmatprep.mubr.f32.mxu0 0.0
  %947 = vmatmul.mubr.f32.gmra.mrb[0].mxu0 %v784
  %v948 = vpop.f32.mrb[0].mxu0
  %v949 = vadd.f32 0.0, %v948
  %v950 = vpop.f32.mrb[0].mxu0
  %v951 = vadd.f32 0.0, %v950
  %952 = vmatprep.mubr.f32.mxu0 0.0
  %953 = vmatmul.mubr.f32.gmra.mrb[0].mxu0 %v787
  %v954 = vpop.f32.mrb[0].mxu0
  %v955 = vadd.f32 0.0, %v954
  %v956 = vpop.f32.mrb[0].mxu0
  %v957 = vadd.f32 0.0, %v956
  %958 = vmatprep.mubr.f32.mxu0 0.0
  %959 = vmatmul.mubr.f32.gmra.mrb[0].mxu0 %v790
  %v960 = vpop.f32.mrb[0].mxu0
  %v961 = vadd.f32 0.0, %v960
  %v962 = vpop.f32.mrb[0].mxu0
  %v963 = vadd.f32 0.0, %v962
  %964 = vdwg.mxu0
  %965 = vmatprep.subr.mxu0 %v698
  %966 = vmatpush1.msra.mxu0 %v697
  %967 = vmatprep.subr.mxu0 %v702
  %968 = vmatpush1.msra.mxu0 %v701
  %969 = vmatprep.subr.mxu0 %v706
  %970 = vmatpush1.msra.mxu0 %v705
  %971 = vmatprep.subr.mxu0 %v710
  %972 = vmatpush1.msra.mxu0 %v709
  %973 = vmatprep.subr.mxu0 %v714
  %974 = vmatpush1.msra.mxu0 %v713
  %975 = vmatprep.subr.mxu0 %v718
  %976 = vmatpush1.msra.mxu0 %v717
  %977 = vmatprep.subr.mxu0 0.0
  %978 = vmatpush1.msra.mxu0 0.0
  %979 = vmatprep.subr.mxu0 0.0
  %980 = vmatpush1.msra.mxu0 0.0
  %981 = vmatprep.subr.mxu0 0.0
  %982 = vmatpush1.msra.mxu0 0.0
  %983 = vmatprep.subr.mxu0 0.0
  %984 = vmatpush1.msra.mxu0 0.0
  %985 = vmatprep.subr.mxu0 0.0
  %986 = vmatpush1.msra.mxu0 0.0
  %987 = vmatprep.subr.mxu0 0.0
  %988 = vmatpush1.msra.mxu0 0.0
  %989 = vmatprep.subr.mxu0 0.0
  %990 = vmatpush1.msra.mxu0 0.0
  %991 = vmatprep.subr.mxu0 0.0
  %992 = vmatpush1.msra.mxu0 0.0
  %993 = vmatprep.subr.mxu0 0.0
  %994 = vmatpush1.msra.mxu0 0.0
  %995 = vmatprep.subr.mxu0 0.0
  %996 = vmatpush1.msra.mxu0 0.0
  %997 = vmatprep.subr.mxu0 0.0
  %998 = vmatpush1.msra.mxu0 0.0
  %999 = vmatprep.subr.mxu0 0.0
  %1000 = vmatpush1.msra.mxu0 0.0
  %1001 = vmatprep.subr.mxu0 0.0
  %1002 = vmatpush1.msra.mxu0 0.0
  %1003 = vmatprep.subr.mxu0 0.0
  %1004 = vmatpush1.msra.mxu0 0.0
  %1005 = vmatprep.subr.mxu0 0.0
  %1006 = vmatpush1.msra.mxu0 0.0
  %1007 = vmatprep.subr.mxu0 0.0
  %1008 = vmatpush1.msra.mxu0 0.0
  %1009 = vmatprep.subr.mxu0 0.0
  %1010 = vmatpush1.msra.mxu0 0.0
  %1011 = vmatprep.subr.mxu0 0.0
  %1012 = vmatpush1.msra.mxu0 0.0
  %1013 = vmatprep.subr.mxu0 0.0
  %1014 = vmatpush1.msra.mxu0 0.0
  %1015 = vmatprep.subr.mxu0 0.0
  %1016 = vmatpush1.msra.mxu0 0.0
  %1017 = vmatprep.subr.mxu0 0.0
  %1018 = vmatpush1.msra.mxu0 0.0
  %1019 = vmatprep.subr.mxu0 0.0
  %1020 = vmatpush1.msra.mxu0 0.0
  %1021 = vmatprep.subr.mxu0 0.0
  %1022 = vmatpush1.msra.mxu0 0.0
  %1023 = vmatprep.subr.mxu0 0.0
  %1024 = vmatpush1.msra.mxu0 0.0
  %1025 = vmatprep.subr.mxu0 0.0
  %1026 = vmatpush1.msra.mxu0 0.0
  %1027 = vmatprep.subr.mxu0 0.0
  %1028 = vmatpush1.msra.mxu0 0.0
  %1029 = vmatprep.mubr.f32.mxu0 0.0
  %1030 = vmatmul.mubr.f32.gmra.mrb[0].mxu0 %v739
  %v1031 = vpop.f32.mrb[0].mxu0
  %v1032 = vadd.f32 0.0, %v1031
  %v1033 = vpop.f32.mrb[0].mxu0
  %v1034 = vadd.f32 0.0, %v1033
  %1035 = vmatprep.mubr.f32.mxu0 0.0
  %1036 = vmatmul.mubr.f32.gmra.mrb[0].mxu0 %v742
  %v1037 = vpop.f32.mrb[0].mxu0
  %v1038 = vadd.f32 0.0, %v1037
  %v1039 = vpop.f32.mrb[0].mxu0
  %v1040 = vadd.f32 0.0, %v1039
  %1041 = vmatprep.mubr.f32.mxu0 0.0
  %1042 = vmatmul.mubr.f32.gmra.mrb[0].mxu0 %v745
  %v1043 = vpop.f32.mrb[0].mxu0
  %v1044 = vadd.f32 0.0, %v1043
  %v1045 = vpop.f32.mrb[0].mxu0
  %v1046 = vadd.f32 0.0, %v1045
  %1047 = vmatprep.mubr.f32.mxu0 0.0
  %1048 = vmatmul.mubr.f32.gmra.mrb[0].mxu0 %v748
  %v1049 = vpop.f32.mrb[0].mxu0
  %v1050 = vadd.f32 0.0, %v1049
  %v1051 = vpop.f32.mrb[0].mxu0
  %v1052 = vadd.f32 0.0, %v1051
  %1053 = vmatprep.mubr.f32.mxu0 0.0
  %1054 = vmatmul.mubr.f32.gmra.mrb[0].mxu0 %v751
  %v1055 = vpop.f32.mrb[0].mxu0
  %v1056 = vadd.f32 0.0, %v1055
  %v1057 = vpop.f32.mrb[0].mxu0
  %v1058 = vadd.f32 0.0, %v1057
  %1059 = vmatprep.mubr.f32.mxu0 0.0
  %1060 = vmatmul.mubr.f32.gmra.mrb[0].mxu0 %v754
  %v1061 = vpop.f32.mrb[0].mxu0
  %v1062 = vadd.f32 0.0, %v1061
  %v1063 = vpop.f32.mrb[0].mxu0
  %v1064 = vadd.f32 0.0, %v1063
  %1065 = vmatprep.mubr.f32.mxu0 0.0
  %1066 = vmatmul.mubr.f32.gmra.mrb[0].mxu0 %v757
  %v1067 = vpop.f32.mrb[0].mxu0
  %v1068 = vadd.f32 0.0, %v1067
  %v1069 = vpop.f32.mrb[0].mxu0
  %v1070 = vadd.f32 0.0, %v1069
  %1071 = vmatprep.mubr.f32.mxu0 0.0
  %1072 = vmatmul.mubr.f32.gmra.mrb[0].mxu0 %v760
  %v1073 = vpop.f32.mrb[0].mxu0
  %v1074 = vadd.f32 0.0, %v1073
  %v1075 = vpop.f32.mrb[0].mxu0
  %v1076 = vadd.f32 0.0, %v1075
  %1077 = vmatprep.mubr.f32.mxu0 0.0
  %1078 = vmatmul.mubr.f32.gmra.mrb[0].mxu0 %v763
  %v1079 = vpop.f32.mrb[0].mxu0
  %v1080 = vadd.f32 0.0, %v1079
  %v1081 = vpop.f32.mrb[0].mxu0
  %v1082 = vadd.f32 0.0, %v1081
  %1083 = vmatprep.mubr.f32.mxu0 0.0
  %1084 = vmatmul.mubr.f32.gmra.mrb[0].mxu0 %v766
  %v1085 = vpop.f32.mrb[0].mxu0
  %v1086 = vadd.f32 0.0, %v1085
  %v1087 = vpop.f32.mrb[0].mxu0
  %v1088 = vadd.f32 0.0, %v1087
  %1089 = vmatprep.mubr.f32.mxu0 0.0
  %1090 = vmatmul.mubr.f32.gmra.mrb[0].mxu0 %v769
  %v1091 = vpop.f32.mrb[0].mxu0
  %v1092 = vadd.f32 0.0, %v1091
  %v1093 = vpop.f32.mrb[0].mxu0
  %v1094 = vadd.f32 0.0, %v1093
  %1095 = vmatprep.mubr.f32.mxu0 0.0
  %1096 = vmatmul.mubr.f32.gmra.mrb[0].mxu0 %v772
  %v1097 = vpop.f32.mrb[0].mxu0
  %v1098 = vadd.f32 0.0, %v1097
  %v1099 = vpop.f32.mrb[0].mxu0
  %v1100 = vadd.f32 0.0, %v1099
  %1101 = vmatprep.mubr.f32.mxu0 0.0
  %1102 = vmatmul.mubr.f32.gmra.mrb[0].mxu0 %v775
  %v1103 = vpop.f32.mrb[0].mxu0
  %v1104 = vadd.f32 0.0, %v1103
  %v1105 = vpop.f32.mrb[0].mxu0
  %v1106 = vadd.f32 0.0, %v1105
  %1107 = vmatprep.mubr.f32.mxu0 0.0
  %1108 = vmatmul.mubr.f32.gmra.mrb[0].mxu0 %v778
  %v1109 = vpop.f32.mrb[0].mxu0
  %v1110 = vadd.f32 0.0, %v1109
  %v1111 = vpop.f32.mrb[0].mxu0
  %v1112 = vadd.f32 0.0, %v1111
  %1113 = vmatprep.mubr.f32.mxu0 0.0
  %1114 = vmatmul.mubr.f32.gmra.mrb[0].mxu0 %v781
  %v1115 = vpop.f32.mrb[0].mxu0
  %v1116 = vadd.f32 0.0, %v1115
  %v1117 = vpop.f32.mrb[0].mxu0
  %v1118 = vadd.f32 0.0, %v1117
  %1119 = vmatprep.mubr.f32.mxu0 0.0
  %1120 = vmatmul.mubr.f32.gmra.mrb[0].mxu0 %v784
  %v1121 = vpop.f32.mrb[0].mxu0
  %v1122 = vadd.f32 0.0, %v1121
  %v1123 = vpop.f32.mrb[0].mxu0
  %v1124 = vadd.f32 0.0, %v1123
  %1125 = vmatprep.mubr.f32.mxu0 0.0
  %1126 = vmatmul.mubr.f32.gmra.mrb[0].mxu0 %v787
  %v1127 = vpop.f32.mrb[0].mxu0
  %v1128 = vadd.f32 0.0, %v1127
  %v1129 = vpop.f32.mrb[0].mxu0
  %v1130 = vadd.f32 0.0, %v1129
  %1131 = vmatprep.mubr.f32.mxu0 0.0
  %1132 = vmatmul.mubr.f32.gmra.mrb[0].mxu0 %v790
  %v1133 = vpop.f32.mrb[0].mxu0
  %v1134 = vadd.f32 0.0, %v1133
  %v1135 = vpop.f32.mrb[0].mxu0
  %v1136 = vadd.f32 0.0, %v1135
  %1137 = vdwg.mxu0
  %1138 = vrot.lane.b32.xlu0 %v859, 17
  %v1139 = vpop.permute.xlu0 %1138
  %1140 = vrot.lane.b32.xlu0 %v865, 17
  %v1141 = vpop.permute.xlu0 %1140
  %1142 = vrot.lane.b32.xlu0 %v861, 17
  %v1143 = vpop.permute.xlu0 %1142
  %1144 = vrot.lane.b32.xlu0 %v867, 17
  %v1145 = vpop.permute.xlu0 %1144
  %1146 = vrot.lane.b32.xlu0 %v1032, 17
  %v1147 = vpop.permute.xlu0 %1146
  %1148 = vrot.lane.b32.xlu0 %v1038, 17
  %v1149 = vpop.permute.xlu0 %1148
  %1150 = vrot.lane.b32.xlu0 %v1034, 17
  %v1151 = vpop.permute.xlu0 %1150
  %1152 = vrot.lane.b32.xlu0 %v1040, 17
  %v1153 = vpop.permute.xlu0 %1152
  %v1154 = vlaneseq
  %v1155 = vand.u32 %v1154, 127
  %vm1156 = vcmp.lt.s32.totalorder %v1155, 17
  %v1157 = vsel %vm1156, %v1147, %v1151
  %v1158 = vsel %vm1156, %v1149, %v1153
  %v1159 = vsel %vm1156, %v1143, %v1147
  %v1160 = vsel %vm1156, %v1145, %v1149
  %v1161 = vsel %vm1156, %v1139, %v1143
  %v1162 = vsel %vm1156, %v1141, %v1145
  %v1163 = vsel %vm1156, %v1151, %v1139
  %v1164 = vsel %vm1156, %v1153, %v1141
  %v1165 = vld [vmem:[%s7] sm:$0xf]
  %v1167 = vlaneseq
  %v1168 = vshrl.u32 %v1167, 7
  %v1169 = vsub.s32 0, %v1168
  %v1170 = vrot.slane %v1165, %v1169
  %v1171 = vlaneseq
  %v1172 = vshrl.u32 %v1171, 7
  %v1173 = vsub.s32 1, %v1172
  %v1174 = vrot.slane %v1165, %v1173
  %v1175 = vlaneseq
  %v1176 = vshrl.u32 %v1175, 7
  %v1177 = vsub.s32 2, %v1176
  %v1178 = vrot.slane %v1165, %v1177
  %v1179 = vlaneseq
  %v1180 = vshrl.u32 %v1179, 7
  %v1181 = vsub.s32 3, %v1180
  %v1182 = vrot.slane %v1165, %v1181
  %v1187 = vmul.f32 %v1163, %v1170
  %v1188 = vmul.f32 %v1161, %v1174
  %v1189 = vmul.f32 %v1159, %v1178
  %v1190 = vmul.f32 %v1157, %v1182
  %v1191 = vmul.f32 %v1164, %v1170
  %v1192 = vmul.f32 %v1162, %v1174
  %v1193 = vmul.f32 %v1160, %v1178
  %v1194 = vmul.f32 %v1158, %v1182
  %v1195 = vadd.f32 %v907, %v1187
  %v1196 = vadd.f32 %v909, %v1188
  %v1197 = vadd.f32 %v1080, %v1189
  %v1198 = vadd.f32 %v1082, %v1190
  %v1199 = vadd.f32 %v913, %v1191
  %v1200 = vadd.f32 %v915, %v1192
  %v1201 = vadd.f32 %v1086, %v1193
  %v1202 = vadd.f32 %v1088, %v1194
  %1203 = vrot.lane.b32.xlu0 %v871, 16
  %v1204 = vpop.permute.xlu0 %1203
  %1205 = vrot.lane.b32.xlu0 %v877, 16
  %v1206 = vpop.permute.xlu0 %1205
  %1207 = vrot.lane.b32.xlu0 %v873, 16
  %v1208 = vpop.permute.xlu0 %1207
  %1209 = vrot.lane.b32.xlu0 %v879, 16
  %v1210 = vpop.permute.xlu0 %1209
  %1211 = vrot.lane.b32.xlu0 %v1044, 16
  %v1212 = vpop.permute.xlu0 %1211
  %1213 = vrot.lane.b32.xlu0 %v1050, 16
  %v1214 = vpop.permute.xlu0 %1213
  %1215 = vrot.lane.b32.xlu0 %v1046, 16
  %v1216 = vpop.permute.xlu0 %1215
  %1217 = vrot.lane.b32.xlu0 %v1052, 16
  %v1218 = vpop.permute.xlu0 %1217
  %vm1219 = vcmp.lt.s32.totalorder %v1155, 16
  %v1220 = vsel %vm1219, %v1212, %v1216
  %v1221 = vsel %vm1219, %v1214, %v1218
  %v1222 = vsel %vm1219, %v1208, %v1212
  %v1223 = vsel %vm1219, %v1210, %v1214
  %v1224 = vsel %vm1219, %v1204, %v1208
  %v1225 = vsel %vm1219, %v1206, %v1210
  %v1226 = vsel %vm1219, %v1216, %v1204
  %v1227 = vsel %vm1219, %v1218, %v1206
  %s1228 = scalar_lea.vmem %s7, 4
  %v1229 = vld [vmem:[%s1228] sm:$0xf]
  %v1231 = vlaneseq
  %v1232 = vshrl.u32 %v1231, 7
  %v1233 = vsub.s32 0, %v1232
  %v1234 = vrot.slane %v1229, %v1233
  %v1235 = vlaneseq
  %v1236 = vshrl.u32 %v1235, 7
  %v1237 = vsub.s32 1, %v1236
  %v1238 = vrot.slane %v1229, %v1237
  %v1239 = vlaneseq
  %v1240 = vshrl.u32 %v1239, 7
  %v1241 = vsub.s32 2, %v1240
  %v1242 = vrot.slane %v1229, %v1241
  %v1243 = vlaneseq
  %v1244 = vshrl.u32 %v1243, 7
  %v1245 = vsub.s32 3, %v1244
  %v1246 = vrot.slane %v1229, %v1245
  %v1251 = vmul.f32 %v1226, %v1234
  %v1252 = vmul.f32 %v1224, %v1238
  %v1253 = vmul.f32 %v1222, %v1242
  %v1254 = vmul.f32 %v1220, %v1246
  %v1255 = vmul.f32 %v1227, %v1234
  %v1256 = vmul.f32 %v1225, %v1238
  %v1257 = vmul.f32 %v1223, %v1242
  %v1258 = vmul.f32 %v1221, %v1246
  %v1259 = vadd.f32 %v1195, %v1251
  %v1260 = vadd.f32 %v1196, %v1252
  %v1261 = vadd.f32 %v1197, %v1253
  %v1262 = vadd.f32 %v1198, %v1254
  %v1263 = vadd.f32 %v1199, %v1255
  %v1264 = vadd.f32 %v1200, %v1256
  %v1265 = vadd.f32 %v1201, %v1257
  %v1266 = vadd.f32 %v1202, %v1258
  %1267 = vrot.lane.b32.xlu0 %v883, 15
  %v1268 = vpop.permute.xlu0 %1267
  %1269 = vrot.lane.b32.xlu0 %v889, 15
  %v1270 = vpop.permute.xlu0 %1269
  %1271 = vrot.lane.b32.xlu0 %v885, 15
  %v1272 = vpop.permute.xlu0 %1271
  %1273 = vrot.lane.b32.xlu0 %v891, 15
  %v1274 = vpop.permute.xlu0 %1273
  %1275 = vrot.lane.b32.xlu0 %v1056, 15
  %v1276 = vpop.permute.xlu0 %1275
  %1277 = vrot.lane.b32.xlu0 %v1062, 15
  %v1278 = vpop.permute.xlu0 %1277
  %1279 = vrot.lane.b32.xlu0 %v1058, 15
  %v1280 = vpop.permute.xlu0 %1279
  %1281 = vrot.lane.b32.xlu0 %v1064, 15
  %v1282 = vpop.permute.xlu0 %1281
  %vm1283 = vcmp.lt.s32.totalorder %v1155, 15
  %v1284 = vsel %vm1283, %v1276, %v1280
  %v1285 = vsel %vm1283, %v1278, %v1282
  %v1286 = vsel %vm1283, %v1272, %v1276
  %v1287 = vsel %vm1283, %v1274, %v1278
  %v1288 = vsel %vm1283, %v1268, %v1272
  %v1289 = vsel %vm1283, %v1270, %v1274
  %v1290 = vsel %vm1283, %v1280, %v1268
  %v1291 = vsel %vm1283, %v1282, %v1270
  %s1292 = scalar_lea.vmem %s7, 8
  %v1293 = vld [vmem:[%s1292] sm:$0xf]
  %v1295 = vlaneseq
  %v1296 = vshrl.u32 %v1295, 7
  %v1297 = vsub.s32 0, %v1296
  %v1298 = vrot.slane %v1293, %v1297
  %v1299 = vlaneseq
  %v1300 = vshrl.u32 %v1299, 7
  %v1301 = vsub.s32 1, %v1300
  %v1302 = vrot.slane %v1293, %v1301
  %v1303 = vlaneseq
  %v1304 = vshrl.u32 %v1303, 7
  %v1305 = vsub.s32 2, %v1304
  %v1306 = vrot.slane %v1293, %v1305
  %v1307 = vlaneseq
  %v1308 = vshrl.u32 %v1307, 7
  %v1309 = vsub.s32 3, %v1308
  %v1310 = vrot.slane %v1293, %v1309
  %v1315 = vmul.f32 %v1290, %v1298
  %v1316 = vmul.f32 %v1288, %v1302
  %v1317 = vmul.f32 %v1286, %v1306
  %v1318 = vmul.f32 %v1284, %v1310
  %v1319 = vmul.f32 %v1291, %v1298
  %v1320 = vmul.f32 %v1289, %v1302
  %v1321 = vmul.f32 %v1287, %v1306
  %v1322 = vmul.f32 %v1285, %v1310
  %v1323 = vadd.f32 %v1259, %v1315
  %v1324 = vadd.f32 %v1260, %v1316
  %v1325 = vadd.f32 %v1261, %v1317
  %v1326 = vadd.f32 %v1262, %v1318
  %v1327 = vadd.f32 %v1263, %v1319
  %v1328 = vadd.f32 %v1264, %v1320
  %v1329 = vadd.f32 %v1265, %v1321
  %v1330 = vadd.f32 %v1266, %v1322
  %1331 = vrot.lane.b32.xlu0 %v895, 1
  %v1332 = vpop.permute.xlu0 %1331
  %1333 = vrot.lane.b32.xlu0 %v901, 1
  %v1334 = vpop.permute.xlu0 %1333
  %1335 = vrot.lane.b32.xlu0 %v897, 1
  %v1336 = vpop.permute.xlu0 %1335
  %1337 = vrot.lane.b32.xlu0 %v903, 1
  %v1338 = vpop.permute.xlu0 %1337
  %1339 = vrot.lane.b32.xlu0 %v1068, 1
  %v1340 = vpop.permute.xlu0 %1339
  %1341 = vrot.lane.b32.xlu0 %v1074, 1
  %v1342 = vpop.permute.xlu0 %1341
  %1343 = vrot.lane.b32.xlu0 %v1070, 1
  %v1344 = vpop.permute.xlu0 %1343
  %1345 = vrot.lane.b32.xlu0 %v1076, 1
  %v1346 = vpop.permute.xlu0 %1345
  %vm1347 = vcmp.lt.s32.totalorder %v1155, 1
  %v1348 = vsel %vm1347, %v1340, %v1344
  %v1349 = vsel %vm1347, %v1342, %v1346
  %v1350 = vsel %vm1347, %v1336, %v1340
  %v1351 = vsel %vm1347, %v1338, %v1342
  %v1352 = vsel %vm1347, %v1332, %v1336
  %v1353 = vsel %vm1347, %v1334, %v1338
  %v1354 = vsel %vm1347, %v1344, %v1332
  %v1355 = vsel %vm1347, %v1346, %v1334
  %s1356 = scalar_lea.vmem %s7, 12
  %v1357 = vld [vmem:[%s1356] sm:$0xf]
  %v1359 = vlaneseq
  %v1360 = vshrl.u32 %v1359, 7
  %v1361 = vsub.s32 0, %v1360
  %v1362 = vrot.slane %v1357, %v1361
  %v1363 = vlaneseq
  %v1364 = vshrl.u32 %v1363, 7
  %v1365 = vsub.s32 1, %v1364
  %v1366 = vrot.slane %v1357, %v1365
  %v1367 = vlaneseq
  %v1368 = vshrl.u32 %v1367, 7
  %v1369 = vsub.s32 2, %v1368
  %v1370 = vrot.slane %v1357, %v1369
  %v1371 = vlaneseq
  %v1372 = vshrl.u32 %v1371, 7
  %v1373 = vsub.s32 3, %v1372
  %v1374 = vrot.slane %v1357, %v1373
  %v1379 = vmul.f32 %v1354, %v1362
  %v1380 = vmul.f32 %v1352, %v1366
  %v1381 = vmul.f32 %v1350, %v1370
  %v1382 = vmul.f32 %v1348, %v1374
  %v1383 = vmul.f32 %v1355, %v1362
  %v1384 = vmul.f32 %v1353, %v1366
  %v1385 = vmul.f32 %v1351, %v1370
  %v1386 = vmul.f32 %v1349, %v1374
  %v1387 = vadd.f32 %v1323, %v1379
  %v1388 = vadd.f32 %v1324, %v1380
  %v1389 = vadd.f32 %v1325, %v1381
  %v1390 = vadd.f32 %v1326, %v1382
  %v1391 = vadd.f32 %v1327, %v1383
  %v1392 = vadd.f32 %v1328, %v1384
  %v1393 = vadd.f32 %v1329, %v1385
  %v1394 = vadd.f32 %v1330, %v1386
  %1395 = vrot.lane.b32.xlu0 %v919, 127
  %v1396 = vpop.permute.xlu0 %1395
  %1397 = vrot.lane.b32.xlu0 %v925, 127
  %v1398 = vpop.permute.xlu0 %1397
  %1399 = vrot.lane.b32.xlu0 %v921, 127
  %v1400 = vpop.permute.xlu0 %1399
  %1401 = vrot.lane.b32.xlu0 %v927, 127
  %v1402 = vpop.permute.xlu0 %1401
  %1403 = vrot.lane.b32.xlu0 %v1092, 127
  %v1404 = vpop.permute.xlu0 %1403
  %1405 = vrot.lane.b32.xlu0 %v1098, 127
  %v1406 = vpop.permute.xlu0 %1405
  %1407 = vrot.lane.b32.xlu0 %v1094, 127
  %v1408 = vpop.permute.xlu0 %1407
  %1409 = vrot.lane.b32.xlu0 %v1100, 127
  %v1410 = vpop.permute.xlu0 %1409
  %vm1411 = vcmp.lt.s32.totalorder %v1155, 127
  %v1412 = vsel %vm1411, %v1404, %v1408
  %v1413 = vsel %vm1411, %v1406, %v1410
  %v1414 = vsel %vm1411, %v1400, %v1404
  %v1415 = vsel %vm1411, %v1402, %v1406
  %v1416 = vsel %vm1411, %v1396, %v1400
  %v1417 = vsel %vm1411, %v1398, %v1402
  %v1418 = vsel %vm1411, %v1408, %v1396
  %v1419 = vsel %vm1411, %v1410, %v1398
  %s1420 = scalar_lea.vmem %s7, 20
  %v1421 = vld [vmem:[%s1420] sm:$0xf]
  %v1423 = vlaneseq
  %v1424 = vshrl.u32 %v1423, 7
  %v1425 = vsub.s32 0, %v1424
  %v1426 = vrot.slane %v1421, %v1425
  %v1427 = vlaneseq
  %v1428 = vshrl.u32 %v1427, 7
  %v1429 = vsub.s32 1, %v1428
  %v1430 = vrot.slane %v1421, %v1429
  %v1431 = vlaneseq
  %v1432 = vshrl.u32 %v1431, 7
  %v1433 = vsub.s32 2, %v1432
  %v1434 = vrot.slane %v1421, %v1433
  %v1435 = vlaneseq
  %v1436 = vshrl.u32 %v1435, 7
  %v1437 = vsub.s32 3, %v1436
  %v1438 = vrot.slane %v1421, %v1437
  %v1443 = vmul.f32 %v1416, %v1426
  %v1444 = vmul.f32 %v1414, %v1430
  %v1445 = vmul.f32 %v1412, %v1434
  %v1446 = vmul.f32 %v1418, %v1438
  %v1447 = vmul.f32 %v1417, %v1426
  %v1448 = vmul.f32 %v1415, %v1430
  %v1449 = vmul.f32 %v1413, %v1434
  %v1450 = vmul.f32 %v1419, %v1438
  %v1451 = vadd.f32 %v1387, %v1443
  %v1452 = vadd.f32 %v1388, %v1444
  %v1453 = vadd.f32 %v1389, %v1445
  %v1454 = vadd.f32 %v1390, %v1446
  %v1455 = vadd.f32 %v1391, %v1447
  %v1456 = vadd.f32 %v1392, %v1448
  %v1457 = vadd.f32 %v1393, %v1449
  %v1458 = vadd.f32 %v1394, %v1450
  %1459 = vrot.lane.b32.xlu0 %v931, 113
  %v1460 = vpop.permute.xlu0 %1459
  %1461 = vrot.lane.b32.xlu0 %v937, 113
  %v1462 = vpop.permute.xlu0 %1461
  %1463 = vrot.lane.b32.xlu0 %v933, 113
  %v1464 = vpop.permute.xlu0 %1463
  %1465 = vrot.lane.b32.xlu0 %v939, 113
  %v1466 = vpop.permute.xlu0 %1465
  %1467 = vrot.lane.b32.xlu0 %v1104, 113
  %v1468 = vpop.permute.xlu0 %1467
  %1469 = vrot.lane.b32.xlu0 %v1110, 113
  %v1470 = vpop.permute.xlu0 %1469
  %1471 = vrot.lane.b32.xlu0 %v1106, 113
  %v1472 = vpop.permute.xlu0 %1471
  %1473 = vrot.lane.b32.xlu0 %v1112, 113
  %v1474 = vpop.permute.xlu0 %1473
  %vm1475 = vcmp.lt.s32.totalorder %v1155, 113
  %v1476 = vsel %vm1475, %v1468, %v1472
  %v1477 = vsel %vm1475, %v1470, %v1474
  %v1478 = vsel %vm1475, %v1464, %v1468
  %v1479 = vsel %vm1475, %v1466, %v1470
  %v1480 = vsel %vm1475, %v1460, %v1464
  %v1481 = vsel %vm1475, %v1462, %v1466
  %v1482 = vsel %vm1475, %v1472, %v1460
  %v1483 = vsel %vm1475, %v1474, %v1462
  %s1484 = scalar_lea.vmem %s7, 24
  %v1485 = vld [vmem:[%s1484] sm:$0xf]
  %v1487 = vlaneseq
  %v1488 = vshrl.u32 %v1487, 7
  %v1489 = vsub.s32 0, %v1488
  %v1490 = vrot.slane %v1485, %v1489
  %v1491 = vlaneseq
  %v1492 = vshrl.u32 %v1491, 7
  %v1493 = vsub.s32 1, %v1492
  %v1494 = vrot.slane %v1485, %v1493
  %v1495 = vlaneseq
  %v1496 = vshrl.u32 %v1495, 7
  %v1497 = vsub.s32 2, %v1496
  %v1498 = vrot.slane %v1485, %v1497
  %v1499 = vlaneseq
  %v1500 = vshrl.u32 %v1499, 7
  %v1501 = vsub.s32 3, %v1500
  %v1502 = vrot.slane %v1485, %v1501
  %v1507 = vmul.f32 %v1480, %v1490
  %v1508 = vmul.f32 %v1478, %v1494
  %v1509 = vmul.f32 %v1476, %v1498
  %v1510 = vmul.f32 %v1482, %v1502
  %v1511 = vmul.f32 %v1481, %v1490
  %v1512 = vmul.f32 %v1479, %v1494
  %v1513 = vmul.f32 %v1477, %v1498
  %v1514 = vmul.f32 %v1483, %v1502
  %v1515 = vadd.f32 %v1451, %v1507
  %v1516 = vadd.f32 %v1452, %v1508
  %v1517 = vadd.f32 %v1453, %v1509
  %v1518 = vadd.f32 %v1454, %v1510
  %v1519 = vadd.f32 %v1455, %v1511
  %v1520 = vadd.f32 %v1456, %v1512
  %v1521 = vadd.f32 %v1457, %v1513
  %v1522 = vadd.f32 %v1458, %v1514
  %1523 = vrot.lane.b32.xlu0 %v943, 112
  %v1524 = vpop.permute.xlu0 %1523
  %1525 = vrot.lane.b32.xlu0 %v949, 112
  %v1526 = vpop.permute.xlu0 %1525
  %1527 = vrot.lane.b32.xlu0 %v945, 112
  %v1528 = vpop.permute.xlu0 %1527
  %1529 = vrot.lane.b32.xlu0 %v951, 112
  %v1530 = vpop.permute.xlu0 %1529
  %1531 = vrot.lane.b32.xlu0 %v1116, 112
  %v1532 = vpop.permute.xlu0 %1531
  %1533 = vrot.lane.b32.xlu0 %v1122, 112
  %v1534 = vpop.permute.xlu0 %1533
  %1535 = vrot.lane.b32.xlu0 %v1118, 112
  %v1536 = vpop.permute.xlu0 %1535
  %1537 = vrot.lane.b32.xlu0 %v1124, 112
  %v1538 = vpop.permute.xlu0 %1537
  %vm1539 = vcmp.lt.s32.totalorder %v1155, 112
  %v1540 = vsel %vm1539, %v1532, %v1536
  %v1541 = vsel %vm1539, %v1534, %v1538
  %v1542 = vsel %vm1539, %v1528, %v1532
  %v1543 = vsel %vm1539, %v1530, %v1534
  %v1544 = vsel %vm1539, %v1524, %v1528
  %v1545 = vsel %vm1539, %v1526, %v1530
  %v1546 = vsel %vm1539, %v1536, %v1524
  %v1547 = vsel %vm1539, %v1538, %v1526
  %s1548 = scalar_lea.vmem %s7, 28
  %v1549 = vld [vmem:[%s1548] sm:$0xf]
  %v1551 = vlaneseq
  %v1552 = vshrl.u32 %v1551, 7
  %v1553 = vsub.s32 0, %v1552
  %v1554 = vrot.slane %v1549, %v1553
  %v1555 = vlaneseq
  %v1556 = vshrl.u32 %v1555, 7
  %v1557 = vsub.s32 1, %v1556
  %v1558 = vrot.slane %v1549, %v1557
  %v1559 = vlaneseq
  %v1560 = vshrl.u32 %v1559, 7
  %v1561 = vsub.s32 2, %v1560
  %v1562 = vrot.slane %v1549, %v1561
  %v1563 = vlaneseq
  %v1564 = vshrl.u32 %v1563, 7
  %v1565 = vsub.s32 3, %v1564
  %v1566 = vrot.slane %v1549, %v1565
  %v1571 = vmul.f32 %v1544, %v1554
  %v1572 = vmul.f32 %v1542, %v1558
  %v1573 = vmul.f32 %v1540, %v1562
  %v1574 = vmul.f32 %v1546, %v1566
  %v1575 = vmul.f32 %v1545, %v1554
  %v1576 = vmul.f32 %v1543, %v1558
  %v1577 = vmul.f32 %v1541, %v1562
  %v1578 = vmul.f32 %v1547, %v1566
  %v1579 = vadd.f32 %v1515, %v1571
  %v1580 = vadd.f32 %v1516, %v1572
  %v1581 = vadd.f32 %v1517, %v1573
  %v1582 = vadd.f32 %v1518, %v1574
  %v1583 = vadd.f32 %v1519, %v1575
  %v1584 = vadd.f32 %v1520, %v1576
  %v1585 = vadd.f32 %v1521, %v1577
  %v1586 = vadd.f32 %v1522, %v1578
  %1587 = vrot.lane.b32.xlu0 %v955, 111
  %v1588 = vpop.permute.xlu0 %1587
  %1589 = vrot.lane.b32.xlu0 %v961, 111
  %v1590 = vpop.permute.xlu0 %1589
  %1591 = vrot.lane.b32.xlu0 %v957, 111
  %v1592 = vpop.permute.xlu0 %1591
  %1593 = vrot.lane.b32.xlu0 %v963, 111
  %v1594 = vpop.permute.xlu0 %1593
  %1595 = vrot.lane.b32.xlu0 %v1128, 111
  %v1596 = vpop.permute.xlu0 %1595
  %1597 = vrot.lane.b32.xlu0 %v1134, 111
  %v1598 = vpop.permute.xlu0 %1597
  %1599 = vrot.lane.b32.xlu0 %v1130, 111
  %v1600 = vpop.permute.xlu0 %1599
  %1601 = vrot.lane.b32.xlu0 %v1136, 111
  %v1602 = vpop.permute.xlu0 %1601
  %vm1603 = vcmp.lt.s32.totalorder %v1155, 111
  %v1604 = vsel %vm1603, %v1596, %v1600
  %v1605 = vsel %vm1603, %v1598, %v1602
  %v1606 = vsel %vm1603, %v1592, %v1596
  %v1607 = vsel %vm1603, %v1594, %v1598
  %v1608 = vsel %vm1603, %v1588, %v1592
  %v1609 = vsel %vm1603, %v1590, %v1594
  %v1610 = vsel %vm1603, %v1600, %v1588
  %v1611 = vsel %vm1603, %v1602, %v1590
  %s1612 = scalar_lea.vmem %s7, 32
  %v1613 = vld [vmem:[%s1612] sm:$0xf]
  %v1615 = vlaneseq
  %v1616 = vshrl.u32 %v1615, 7
  %v1617 = vsub.s32 0, %v1616
  %v1618 = vrot.slane %v1613, %v1617
  %v1619 = vlaneseq
  %v1620 = vshrl.u32 %v1619, 7
  %v1621 = vsub.s32 1, %v1620
  %v1622 = vrot.slane %v1613, %v1621
  %v1623 = vlaneseq
  %v1624 = vshrl.u32 %v1623, 7
  %v1625 = vsub.s32 2, %v1624
  %v1626 = vrot.slane %v1613, %v1625
  %v1627 = vlaneseq
  %v1628 = vshrl.u32 %v1627, 7
  %v1629 = vsub.s32 3, %v1628
  %v1630 = vrot.slane %v1613, %v1629
  %v1635 = vmul.f32 %v1608, %v1618
  %v1636 = vmul.f32 %v1606, %v1622
  %v1637 = vmul.f32 %v1604, %v1626
  %v1638 = vmul.f32 %v1610, %v1630
  %v1639 = vmul.f32 %v1609, %v1618
  %v1640 = vmul.f32 %v1607, %v1622
  %v1641 = vmul.f32 %v1605, %v1626
  %v1642 = vmul.f32 %v1611, %v1630
  %v1643 = vadd.f32 %v1579, %v1635
  %v1644 = vadd.f32 %v1580, %v1636
  %v1645 = vadd.f32 %v1581, %v1637
  %v1646 = vadd.f32 %v1582, %v1638
  %v1647 = vadd.f32 %v1583, %v1639
  %v1648 = vadd.f32 %v1584, %v1640
  %v1649 = vadd.f32 %v1585, %v1641
  %v1650 = vadd.f32 %v1586, %v1642
  %1651 = vst [vmem:[%s8] sm:$0xff] %v1643
  %1652 = vst [vmem:[%s8 + $0x8] sm:$0xff] %v1644
  %1653 = vst [vmem:[%s8 + $0x10] sm:$0xff] %v1645
  %1654 = vst [vmem:[%s8 + $0x18] sm:$0xff] %v1646
  %1655 = vst [vmem:[%s8 + $0x20] sm:$0xf] %v1647
  %1656 = vst [vmem:[%s8 + $0x28] sm:$0xf] %v1648
  %1657 = vst [vmem:[%s8 + $0x30] sm:$0xf] %v1649
  %1658 = vst [vmem:[%s8 + $0x38] sm:$0xf] %v1650
  %vm1671 = vcmask 1043456
  %v1672 = vrot.slane %v29, 4
  %v1673 = vrot.slane %v30, 4
  %v1674 = vrot.slane %v31, 4
  %v1675 = vrot.slane %v32, 4
  %v1676 = vrot.slane %v33, 4
  %v1677 = vsel %vm1671, %v1672, %v1676
  %v1678 = vrot.slane %v34, 4
  %v1679 = vsel %vm1671, %v1673, %v1678
  %v1680 = vrot.slane %v35, 4
  %v1681 = vsel %vm1671, %v1674, %v1680
  %v1682 = vrot.slane %v36, 4
  %v1683 = vsel %vm1671, %v1675, %v1682
  %v1684 = vrot.slane %v37, 4
  %v1685 = vsel %vm1671, %v1676, %v1684
  %v1686 = vrot.slane %v38, 4
  %v1687 = vsel %vm1671, %v1678, %v1686
  %v1688 = vrot.slane %v39, 4
  %v1689 = vsel %vm1671, %v1680, %v1688
  %v1690 = vrot.slane %v40, 4
  %v1691 = vsel %vm1671, %v1682, %v1690
  %1708 = vst [vmem:[%s8 + $0x20] sm:$0xf0] %v1672
  %1709 = vst [vmem:[%s8 + $0x28] sm:$0xf0] %v1673
  %1710 = vst [vmem:[%s8 + $0x30] sm:$0xf0] %v1674
  %1711 = vst [vmem:[%s8 + $0x38] sm:$0xf0] %v1675
  %1712 = vst [vmem:[%s8 + $0x40] sm:$0xff] %v1677
  %1713 = vst [vmem:[%s8 + $0x48] sm:$0xff] %v1679
  %1714 = vst [vmem:[%s8 + $0x50] sm:$0xff] %v1681
  %1715 = vst [vmem:[%s8 + $0x58] sm:$0xff] %v1683
  %1716 = vst [vmem:[%s8 + $0x60] sm:$0xff] %v1685
  %1717 = vst [vmem:[%s8 + $0x68] sm:$0xff] %v1687
  %1718 = vst [vmem:[%s8 + $0x70] sm:$0xff] %v1689
  %1719 = vst [vmem:[%s8 + $0x78] sm:$0xff] %v1691
  %1720 = vst [vmem:[%s8 + $0x80] sm:$0xf] %v1684
  %1721 = vst [vmem:[%s8 + $0x88] sm:$0xf] %v1686
  %1722 = vst [vmem:[%s8 + $0x90] sm:$0xf] %v1688
  %1723 = vst [vmem:[%s8 + $0x98] sm:$0xf] %v1690
  // Predicated region
  $region34: #{_lambda_.1} parent=0 // pred_check
    _
  $region35: #{_lambda_.1} parent=0 // pred_check_branch
    %1725 = sbr.rel (0) target = $region37
  $region36: #{_lambda_.1} parent=0 // pred_region
    _
  $region37: #{_lambda_.1} parent=0 // pred_fallthru
    _
  // Predicated region
  $region38: #{_lambda_.1} parent=0 // pred_check
    _
  $region39: #{_lambda_.1} parent=0 // pred_check_branch
    %1727 = sbr.rel (0) target = $region41
  $region40: #{_lambda_.1} parent=0 // pred_region
    _
  $region41: #{_lambda_.1} parent=0 // pred_fallthru
    _

</llo_original>
